<compile_context>
chip_gen: v7x
topology: tpu7x:2x2x1
jax: 0.10.0
libtpu: 0.0.40
codegen_flags: <defaults>
</compile_context>

<pallas_src>
import jax
import jax.numpy as jnp
from jax.experimental import pallas as pl
from jax.experimental.pallas import tpu as pltpu


def _round_up(x, m):
    return ((x + m - 1) // m) * m


_VMEM_LIMIT = 64 * 1024 * 1024  # explicit scoped-VMEM ceiling (== v7x physical)


# ------------------------------ Pallas kernels -------------------------------

def conv_stats_kernel(p_ref, w_ref, y_ref, stats_ref):
    """Pass 1: one bf16 MXU matmul per (row-tile, cout-tile) + fused stats.

    p_ref:     (TR, KKC_pad)  bf16 im2col patches for this row tile
    w_ref:     (KKC_pad, TN)  bf16 conv-weight tile (resident across row tiles)
    y_ref:     (TR, TN)       bf16 conv output tile (f32 accum, rounded once)
    stats_ref: (2, TN)        f32 [sum; sum-of-squares] partials for this tile
    """
    y = jnp.dot(p_ref[...], w_ref[...], preferred_element_type=jnp.float32)
    y_ref[...] = y.astype(y_ref.dtype)
    # Direct slice stores (no concat/reshape copy); stats stay float32.
    stats_ref[0:1, :] = jnp.sum(y, axis=0, keepdims=True)
    stats_ref[1:2, :] = jnp.sum(y * y, axis=0, keepdims=True)


def bn_act_kernel(y_ref, scale_ref, shift_ref, o_ref):
    """Pass 2: folded BN (y*scale + shift) + ReLU. f32 math, bf16 in/out."""
    y = y_ref[...].astype(jnp.float32)
    o_ref[...] = jnp.maximum(y * scale_ref[...] + shift_ref[...],
                             0.0).astype(o_ref.dtype)


# --------------------------------- Wrapper -----------------------------------

def conv_bn_act(x_nchw, weight, gamma, beta, *, stride=1, eps=1e-5, row_tile=256):
    """x_nchw: (N, Cin, H, W); weight: (Cout, Cin, K, K) (PyTorch layouts)."""
    n, cin, h, w = x_nchw.shape
    cout, _, k, _ = weight.shape
    pad = k // 2
    ho = (h + 2 * pad - k) // stride + 1
    wo = (w + 2 * pad - k) // stride + 1

    rows = n * ho * wo
    kkc = k * k * cin

    tr = min(row_tile, _round_up(rows, 8))
    rows_pad = _round_up(rows, tr)
    num_tiles = rows_pad // tr
    kkc_pad = _round_up(kkc, 128)

    # Channel layout: keep HBM-resident tensors at the true Cout when it is
    # below one lane tile (avoids up to 16x padded HBM traffic for tiny
    # layers); otherwise pad to a 128 multiple and tile Cout across the grid.
    if cout < 128:
        c_store = cout
        tn = cout
    else:
        c_store = _round_up(cout, 128)
        tn = c_store if c_store <= 256 else (256 if c_store % 256 == 0 else 128)
    num_ctiles = c_store // tn

    # --- wrapper-side im2col, staged in bf16 (halves DMA + VMEM). ---
    dt = jnp.bfloat16
    x_nhwc = jnp.transpose(x_nchw, (0, 2, 3, 1)).astype(dt)
    x_sp = jnp.pad(x_nhwc, ((0, 0), (pad, pad), (pad, pad), (0, 0)))
    cols = []
    for kh in range(k):
        for kw in range(k):
            cols.append(jax.lax.slice(
                x_sp,
                (0, kh, kw, 0),
                (n, kh + (ho - 1) * stride + 1, kw + (wo - 1) * stride + 1, cin),
                (1, stride, stride, 1)))
    if kkc_pad > kkc:  # contraction pad folded into the single concatenate
        cols.append(jnp.zeros((n, ho, wo, kkc_pad - kkc), dtype=dt))
    patches = jnp.concatenate(cols, axis=-1).reshape(rows, kkc_pad)
    if rows_pad > rows:  # row pad appended in one concat, no extra jnp.pad pass
        patches = jnp.concatenate(
            [patches, jnp.zeros((rows_pad - rows, kkc_pad), dtype=dt)], axis=0)
    # TODO(synk): move im2col into pass 1 (x in pl.ANY + manual halo DMA per
    # row tile) so the K^2-inflated patches array never round-trips HBM.

    # Conv weight (Cout,Cin,K,K) -> (K*K*Cin, Cout) matching the (kh,kw,ci)
    # ordering of the im2col concat above, bf16, padded only as needed.
    w_mat = jnp.transpose(weight, (2, 3, 1, 0)).astype(dt).reshape(kkc, cout)
    w_mat = jnp.pad(w_mat, ((0, kkc_pad - kkc), (0, c_store - cout)))

    # --- pass 1: conv (one MXU matmul per tile) + partial batch stats. ---
    conv_out, part_stats = pl.pallas_call(
        conv_stats_kernel,
        out_shape=(
            jax.ShapeDtypeStruct((rows_pad, c_store), dt),
            jax.ShapeDtypeStruct((num_tiles, 2, c_store), jnp.float32),
        ),
        grid=(num_tiles, num_ctiles),
        in_specs=[
            pl.BlockSpec((tr, kkc_pad), lambda i, j: (i, 0)),
            pl.BlockSpec((kkc_pad, tn), lambda i, j: (0, j)),
        ],
        out_specs=(
            pl.BlockSpec((tr, tn), lambda i, j: (i, j)),
            pl.BlockSpec((None, 2, tn), lambda i, j: (i, 0, j)),
        ),
        compiler_params=pltpu.CompilerParams(
            dimension_semantics=("parallel", "parallel"),
            vmem_limit_bytes=_VMEM_LIMIT),
    )(patches, w_mat)

    # --- tiny JAX reduction: fold tiles -> per-channel BN scale/shift (f32). ---
    s = jnp.sum(part_stats[:, 0, :], axis=0)
    ss = jnp.sum(part_stats[:, 1, :], axis=0)
    count = jnp.float32(rows)                      # true element count (no pad)
    mean = s / count
    var = jnp.maximum(ss / count - mean * mean, 0.0)   # biased var (train mode)
    inv_std = jax.lax.rsqrt(var + eps)
    gamma_f = gamma.astype(jnp.float32)
    beta_f = beta.astype(jnp.float32)
    if c_store > cout:
        gamma_f = jnp.pad(gamma_f, (0, c_store - cout), constant_values=1.0)
        beta_f = jnp.pad(beta_f, (0, c_store - cout))
    scale = (gamma_f * inv_std).reshape(1, c_store)
    shift = (beta_f - mean * gamma_f * inv_std).reshape(1, c_store)

    # --- pass 2: normalize + ReLU. Mem-bound -> bigger independent row tile,
    #     write in place over conv_out (same shape/dtype) via aliasing. ---
    tr2 = tr
    while tr2 < 1024 and rows_pad % (tr2 * 2) == 0:
        tr2 *= 2
    num_tiles2 = rows_pad // tr2

    out_mat = pl.pallas_call(
        bn_act_kernel,
        out_shape=jax.ShapeDtypeStruct((rows_pad, c_store), dt),
        grid=(num_tiles2,),
        in_specs=[
            pl.BlockSpec((tr2, c_store), lambda i: (i, 0)),
            pl.BlockSpec((1, c_store), lambda i: (0, 0)),
            pl.BlockSpec((1, c_store), lambda i: (0, 0)),
        ],
        out_specs=pl.BlockSpec((tr2, c_store), lambda i: (i, 0)),
        input_output_aliases={0: 0},
        compiler_params=pltpu.CompilerParams(
            dimension_semantics=("parallel",),
            vmem_limit_bytes=_VMEM_LIMIT),
    )(conv_out, scale, shift)

    # Un-pad + back to NCHW (module contract). Slice/reshape/transpose/cast
    # fuse into the single unavoidable layout copy.
    out = out_mat[:rows, :cout].reshape(n, ho, wo, cout)
    return jnp.transpose(out, (0, 3, 1, 2)).astype(x_nchw.dtype)


# ------------------------------- Reference -----------------------------------

def reference_conv_bn_act(x_nchw, weight, gamma, beta, *, stride=1, eps=1e-5):
    """Pure-JAX f32 reference mirroring Conv2d + BatchNorm2d(train) + ReLU."""
    k = weight.shape[2]
    pad = k // 2
    y = jax.lax.conv_general_dilated(
        x_nchw.astype(jnp.float32), weight.astype(jnp.float32),
        window_strides=(stride, stride),
        padding=((pad, pad), (pad, pad)),
        dimension_numbers=("NCHW", "OIHW", "NCHW"),
    )
    mean = jnp.mean(y, axis=(0, 2, 3), keepdims=True)
    var = jnp.mean((y - mean) ** 2, axis=(0, 2, 3), keepdims=True)
    y = (y - mean) * jax.lax.rsqrt(var + eps)
    y = y * gamma.reshape(1, -1, 1, 1) + beta.reshape(1, -1, 1, 1)
    return jnp.maximum(y, 0.0)


if __name__ == "__main__":
    # Shapes consistent with ConvBnAct(in_chs=4, out_chs=8, kernel_size=3, stride=1)
    N, C_IN, H, W = 2, 4, 16, 16
    C_OUT, K, STRIDE = 8, 3, 1

    key = jax.random.PRNGKey(0)
    kx, kw, kg, kb = jax.random.split(key, 4)

    x = jax.random.normal(kx, (N, C_IN, H, W), dtype=jnp.float32)
    fan_in = C_IN * K * K
    weight = jax.random.normal(kw, (C_OUT, C_IN, K, K), dtype=jnp.float32) / jnp.sqrt(fan_in)
    gamma = 1.0 + 0.1 * jax.random.normal(kg, (C_OUT,), dtype=jnp.float32)
    beta = 0.1 * jax.random.normal(kb, (C_OUT,), dtype=jnp.float32)

    fn = jax.jit(lambda a, b, c, d: conv_bn_act(a, b, c, d, stride=STRIDE))
    out = jax.block_until_ready(fn(x, weight, gamma, beta))

    ref = reference_conv_bn_act(x, weight, gamma, beta, stride=STRIDE)
    assert out.shape == (N, C_OUT, H // STRIDE, W // STRIDE)
    # bf16 staging of patches/weights/conv_out (f32 accumulation) -> relaxed tol.
    assert jnp.allclose(out, ref, atol=5e-2, rtol=5e-2), "mismatch vs reference"

    print("KERNEL_OK")
</pallas_src>

<mosaic_0001>
module attributes {stable_mosaic.version = 11 : i64} {
  func.func @conv_stats_kernel(%arg0: i32, %arg1: i32, %arg2: memref<256x128xbf16, #tpu.memory_space<vmem>>, %arg3: memref<128x8xbf16, #tpu.memory_space<vmem>>, %arg4: memref<256x8xbf16, #tpu.memory_space<vmem>>, %arg5: memref<1x2x8xf32, #tpu.memory_space<vmem>>) attributes {dimension_semantics = [#tpu.dimension_semantics<parallel>, #tpu.dimension_semantics<parallel>], iteration_bounds = array<i64: 2, 1>, scalar_prefetch = 0 : i64, scratch_operands = 0 : i64, tpu.core_type = #tpu.core_type<tc>, window_params = [{transform_indices = @transform_0, window_bounds = array<i64: 256, 128>}, {transform_indices = @transform_1, window_bounds = array<i64: 128, 8>}, {transform_indices = @transform_2, window_bounds = array<i64: 256, 8>}, {transform_indices = @transform_3, window_bounds = array<i64: 1, 2, 8>}]} {
    %c0 = arith.constant 0 : index
    %c0_0 = arith.constant 0 : index
    %0 = vector.load %arg2[%c0, %c0_0] : memref<256x128xbf16, #tpu.memory_space<vmem>>, vector<256x128xbf16>
    %c0_1 = arith.constant 0 : index
    %c0_2 = arith.constant 0 : index
    %1 = vector.load %arg3[%c0_1, %c0_2] : memref<128x8xbf16, #tpu.memory_space<vmem>>, vector<128x8xbf16>
    %cst = arith.constant dense<0.000000e+00> : vector<256x8xf32>
    %2 = tpu.matmul %0, %1, %cst {dimension_numbers = #tpu.dot_dimension_numbers<[1], [0], [0], [1], [0, 0, 1, 1], [], []>} : vector<256x128xbf16>, vector<128x8xbf16>, vector<256x8xf32> -> vector<256x8xf32>
    %3 = arith.truncf %2 : vector<256x8xf32> to vector<256x8xbf16>
    %c0_3 = arith.constant 0 : index
    %c0_4 = arith.constant 0 : index
    %4 = vector.load %arg4[%c0_3, %c0_4] : memref<256x8xbf16, #tpu.memory_space<vmem>>, vector<256x8xbf16>
    tpu.vector_store %arg4[%c0_3, %c0_4], %3 {strides = array<i32>} : memref<256x8xbf16, #tpu.memory_space<vmem>>, vector<256x8xbf16>,
    %cst_5 = arith.constant dense<0.000000e+00> : vector<8xf32>
    %5 = vector.multi_reduction <add>, %2, %cst_5 [0] : vector<256x8xf32> to vector<8xf32>
    %6 = vector.shape_cast %5 : vector<8xf32> to vector<1x8xf32>
    %c0_6 = arith.constant 0 : index
    %c0_7 = arith.constant 0 : index
    %c0_8 = arith.constant 0 : index
    %7 = vector.load %arg5[%c0_6, %c0_7, %c0_8] : memref<1x2x8xf32, #tpu.memory_space<vmem>>, vector<1x1x8xf32>
    %8 = vector.shape_cast %7 : vector<1x1x8xf32> to vector<1x8xf32>
    %9 = vector.shape_cast %6 : vector<1x8xf32> to vector<1x1x8xf32>
    tpu.vector_store %arg5[%c0_6, %c0_7, %c0_8], %9 {strides = array<i32>} : memref<1x2x8xf32, #tpu.memory_space<vmem>>, vector<1x1x8xf32>,
    %10 = arith.mulf %2, %2 : vector<256x8xf32>
    %cst_9 = arith.constant dense<0.000000e+00> : vector<8xf32>
    %11 = vector.multi_reduction <add>, %10, %cst_9 [0] : vector<256x8xf32> to vector<8xf32>
    %12 = vector.shape_cast %11 : vector<8xf32> to vector<1x8xf32>
    %c0_10 = arith.constant 0 : index
    %c1 = arith.constant 1 : index
    %c0_11 = arith.constant 0 : index
    %13 = vector.load %arg5[%c0_10, %c1, %c0_11] : memref<1x2x8xf32, #tpu.memory_space<vmem>>, vector<1x1x8xf32>
    %14 = vector.shape_cast %13 : vector<1x1x8xf32> to vector<1x8xf32>
    %15 = vector.shape_cast %12 : vector<1x8xf32> to vector<1x1x8xf32>
    tpu.vector_store %arg5[%c0_10, %c1, %c0_11], %15 {strides = array<i32>} : memref<1x2x8xf32, #tpu.memory_space<vmem>>, vector<1x1x8xf32>,
    return
  }
  func.func @transform_0(%arg0: i32, %arg1: i32) -> (i32, i32) {
    %c0_i32 = arith.constant 0 : i32
    %c0_i32_0 = arith.constant 0 : i32
    return %arg0, %c0_i32 : i32, i32
  }
  func.func @transform_1(%arg0: i32, %arg1: i32) -> (i32, i32) {
    %c0_i32 = arith.constant 0 : i32
    %c0_i32_0 = arith.constant 0 : i32
    return %c0_i32, %arg1 : i32, i32
  }
  func.func @transform_2(%arg0: i32, %arg1: i32) -> (i32, i32) {
    %c0_i32 = arith.constant 0 : i32
    return %arg0, %arg1 : i32, i32
  }
  func.func @transform_3(%arg0: i32, %arg1: i32) -> (i32, i32, i32) {
    %c0_i32 = arith.constant 0 : i32
    %c0_i32_0 = arith.constant 0 : i32
    return %arg0, %c0_i32, %arg1 : i32, i32, i32
  }
}

module attributes {stable_mosaic.version = 11 : i64} {
  func.func @bn_act_kernel(%arg0: i32, %arg1: memref<512x8xbf16, #tpu.memory_space<vmem>>, %arg2: memref<1x8xf32, #tpu.memory_space<vmem>>, %arg3: memref<1x8xf32, #tpu.memory_space<vmem>>, %arg4: memref<512x8xbf16, #tpu.memory_space<vmem>>) attributes {dimension_semantics = [#tpu.dimension_semantics<parallel>], iteration_bounds = array<i64: 1>, scalar_prefetch = 0 : i64, scratch_operands = 0 : i64, tpu.core_type = #tpu.core_type<tc>, window_params = [{transform_indices = @transform_0, window_bounds = array<i64: 512, 8>}, {pipeline_mode = #tpu.pipeline_mode<synchronous>, transform_indices = @transform_1, window_bounds = array<i64: 1, 8>}, {pipeline_mode = #tpu.pipeline_mode<synchronous>, transform_indices = @transform_2, window_bounds = array<i64: 1, 8>}, {transform_indices = @transform_3, window_bounds = array<i64: 512, 8>}]} {
    %c0 = arith.constant 0 : index
    %c0_0 = arith.constant 0 : index
    %0 = vector.load %arg1[%c0, %c0_0] : memref<512x8xbf16, #tpu.memory_space<vmem>>, vector<512x8xbf16>
    %1 = arith.extf %0 : vector<512x8xbf16> to vector<512x8xf32>
    %c0_1 = arith.constant 0 : index
    %c0_2 = arith.constant 0 : index
    %2 = vector.load %arg2[%c0_1, %c0_2] : memref<1x8xf32, #tpu.memory_space<vmem>>, vector<1x8xf32>
    %3 = vector.broadcast %2 : vector<1x8xf32> to vector<512x8xf32>
    %4 = arith.mulf %1, %3 : vector<512x8xf32>
    %c0_3 = arith.constant 0 : index
    %c0_4 = arith.constant 0 : index
    %5 = vector.load %arg3[%c0_3, %c0_4] : memref<1x8xf32, #tpu.memory_space<vmem>>, vector<1x8xf32>
    %6 = vector.broadcast %5 : vector<1x8xf32> to vector<512x8xf32>
    %7 = arith.addf %4, %6 : vector<512x8xf32>
    %cst = arith.constant 0.000000e+00 : f32
    %8 = vector.broadcast %cst : f32 to vector<512x8xf32>
    %9 = arith.maximumf %7, %8 : vector<512x8xf32>
    %10 = arith.truncf %9 : vector<512x8xf32> to vector<512x8xbf16>
    %c0_5 = arith.constant 0 : index
    %c0_6 = arith.constant 0 : index
    %11 = vector.load %arg4[%c0_5, %c0_6] : memref<512x8xbf16, #tpu.memory_space<vmem>>, vector<512x8xbf16>
    tpu.vector_store %arg4[%c0_5, %c0_6], %10 {strides = array<i32>} : memref<512x8xbf16, #tpu.memory_space<vmem>>, vector<512x8xbf16>,
    return
  }
  func.func @transform_0(%arg0: i32) -> (i32, i32) {
    %c0_i32 = arith.constant 0 : i32
    %c0_i32_0 = arith.constant 0 : i32
    return %arg0, %c0_i32 : i32, i32
  }
  func.func @transform_1(%arg0: i32) -> (i32, i32) {
    %c0_i32 = arith.constant 0 : i32
    %c0_i32_0 = arith.constant 0 : i32
    %c0_i32_1 = arith.constant 0 : i32
    return %c0_i32, %c0_i32_0 : i32, i32
  }
  func.func @transform_2(%arg0: i32) -> (i32, i32) {
    %c0_i32 = arith.constant 0 : i32
    %c0_i32_0 = arith.constant 0 : i32
    %c0_i32_1 = arith.constant 0 : i32
    return %c0_i32, %c0_i32_0 : i32, i32
  }
  func.func @transform_3(%arg0: i32) -> (i32, i32) {
    %c0_i32 = arith.constant 0 : i32
    %c0_i32_0 = arith.constant 0 : i32
    return %arg0, %c0_i32 : i32, i32
  }
}

</mosaic_0001>

<llo_original>
// kernel: _lambda_.2
$region0: #{_lambda_.2}
  #allocation0 [shape = 'u32[]', space=smem, size = 0x4, offset = 0x4, fixed_abs, tag = 'smem constant byte address 0x4 - core index']
  #allocation1 [shape = 'u32[144,128]{1,0:T(1,128)}', space=vmem, size = 0x12000, scoped, tag = 'internal scratch']
  %s0 = inlined_call_operand.hbm [shape: bf16[512,128], index: 0, kind: input, shape index: {}]
  %s1 = inlined_call_operand.hbm [shape: bf16[128,8], index: 1, kind: input, shape index: {}]
  %s2 = inlined_call_operand.hbm [shape: bf16[512,8], index: 2, kind: output, shape index: {0}]
  %s3 = inlined_call_operand.hbm [shape: f32[2,2,8], index: 3, kind: output, shape index: {1}]
  %4 = xla_tuple %s2, %s3
  %s5 = sld [smem:[#allocation0]]
  $region57: #{_lambda_.2} parent=0
    _
  %s7 = ssub.s32 1, %s5
  %s8 = scalar_select 0, %s7, %s5
  $region1: #{_lambda_.2} parent=0
    #allocation2 [shape = 'u8[131072]{0}', space=vmem, size = 0x20000, scoped, tag = 'input window, operand 0']
    #allocation3 [shape = 's32[2]{0}', space=sflag, size = 0x8, scoped, tag = 'scoped memory for _lambda_.2']
    #allocation4 [shape = 's32[2]{0}', space=sflag, size = 0x8, scoped, tag = 'scoped memory for _lambda_.2']
    #allocation5 [shape = 'u8[32768]{0}', space=vmem, size = 0x8000, scoped, tag = 'input window, operand 1, single buffered']
    #allocation6 [shape = 's32[1]{0}', space=sflag, size = 0x4, scoped, tag = 'scoped memory for _lambda_.2']
    #allocation7 [shape = 'u8[131072]{0}', space=vmem, size = 0x20000, scoped, tag = 'output window, operand 0']
    #allocation8 [shape = 'u8[2048]{0}', space=vmem, size = 0x800, scoped, tag = 'output window, operand 1']
    #allocation9 [shape = 's32[2]{0}', space=sflag, size = 0x8, scoped, tag = 'scoped memory for _lambda_.2']
    %9 = vsyncpa [#allocation3], 0
    %s10 = scalar_lea.sflag [#allocation3], 1
    %11 = vsyncpa %s10, 0
    %12 = vsyncpa [#allocation6], 0
    %13 = vsyncpa [#allocation4], 0
    %s14 = scalar_lea.sflag [#allocation4], 1
    %15 = vsyncpa %s14, 0
    %16 = vsyncpa [#allocation9], 0
    %s17 = scalar_lea.sflag [#allocation9], 1
    %18 = vsyncpa %s17, 0
    loop: start=0, step=1, limit=4
    $region2: #{_lambda_.2} parent=1 // loop_pre_header
      _
    $region3: #{_lambda_.2} parent=1 // loop_header
      %s20 = sphi 0, %s24
      %p21 = scmp.ge.s32.totalorder %s20, 4
      %s27 = sphi 0, %s39
      %s28 = sphi 0, %s35
      %s29 = sphi 0, %s27
      %s30 = sphi 0, %s28
      %s31 = sphi 0, %s29
      %s32 = sphi 0, %s30
      %s42 = sphi 0, %s44
      %s45 = sphi 0, %s42
      %s46 = sphi 0, %s45
      %s62 = sphi 0, %s46
      %s68 = sphi 0, %s70
      %s71 = sphi 0, %s68
      %s72 = sphi 0, %s71
      %s88 = sphi 0, %s72
      %s96 = sphi 0, %s98
      %s99 = sphi 0, %s96
      %s100 = sphi 0, %s99
      %s116 = sphi 0, %s100
      %s124 = sphi 0, %s126
      %s127 = sphi 0, %s124
      %s128 = sphi 0, %s127
      %s144 = sphi 0, %s128
    $region4: #{_lambda_.2} parent=1 // loop_header_branch
      %23 = sbr.rel (%p21) target = $region8
    $region5: #{_lambda_.2} parent=1 // loop_body
      %s25 = ssub.s32 %s20, 1
      %s26 = ssub.s32 %s20, 2
      %s33 = sadd.s32 1, %s28
      %p34 = scmp.ge.s32.totalorder %s33, 1
      %s35 = scalar_select %p34, 0, %s33
      %s36 = sadd.s32 1, %s27
      %s37 = scalar_select %p34, %s36, %s27
      %p38 = scmp.ge.s32.totalorder %s37, 2
      %s39 = scalar_select %p38, 0, %s37
      %s40 = ssub.s32 %s27, %s39
      %p41 = scmp.eq.s32.totalorder %s40, 0
      %s43 = sadd.s32 %s42, 1
      %s44 = scalar_select %p41, %s42, %s43
      %p47 = pneg %p41
      %p48 = scmp.eq.s32.totalorder %s20, 1
      %p49 = por %p47, %p48
      %p50 = scmp.ne.s32.totalorder %s42, %s45
      %p51 = scmp.eq.s32.totalorder %s20, 0
      %p52 = por %p50, %p51
      %p53 = scmp.ne.s32.totalorder %s42, %s45
      %p54 = scmp.eq.s32.totalorder %s25, 1
      %p55 = por %p53, %p54
      %p56 = scmp.ne.s32.totalorder %s45, %s46
      %p57 = scmp.eq.s32.totalorder %s25, 0
      %p58 = por %p56, %p57
      %p59 = scmp.ne.s32.totalorder %s45, %s46
      %p60 = scmp.eq.s32.totalorder %s26, 1
      %p61 = por %p59, %p60
      %p63 = scmp.ne.s32.totalorder %s46, %s62
      %p64 = scmp.eq.s32.totalorder %s26, 0
      %p65 = por %p63, %p64
      %s66 = ssub.s32 %s28, %s35
      %p67 = scmp.eq.s32.totalorder %s66, 0
      %s69 = sadd.s32 %s68, 1
      %s70 = scalar_select %p67, %s68, %s69
      %p73 = pneg %p67
      %p74 = scmp.eq.s32.totalorder %s20, 1
      %p75 = por %p73, %p74
      %p76 = scmp.ne.s32.totalorder %s68, %s71
      %p77 = scmp.eq.s32.totalorder %s20, 0
      %p78 = por %p76, %p77
      %p79 = scmp.ne.s32.totalorder %s68, %s71
      %p80 = scmp.eq.s32.totalorder %s25, 1
      %p81 = por %p79, %p80
      %p82 = scmp.ne.s32.totalorder %s71, %s72
      %p83 = scmp.eq.s32.totalorder %s25, 0
      %p84 = por %p82, %p83
      %p85 = scmp.ne.s32.totalorder %s71, %s72
      %p86 = scmp.eq.s32.totalorder %s26, 1
      %p87 = por %p85, %p86
      %p89 = scmp.ne.s32.totalorder %s72, %s88
      %p90 = scmp.eq.s32.totalorder %s26, 0
      %p91 = por %p89, %p90
      %s92 = ssub.s32 %s27, %s39
      %s93 = ssub.s32 %s28, %s35
      %s94 = sor.u32 %s92, %s93
      %p95 = scmp.eq.s32.totalorder %s94, 0
      %s97 = sadd.s32 %s96, 1
      %s98 = scalar_select %p95, %s96, %s97
      %p101 = pneg %p95
      %p102 = scmp.eq.s32.totalorder %s20, 1
      %p103 = por %p101, %p102
      %p104 = scmp.ne.s32.totalorder %s96, %s99
      %p105 = scmp.eq.s32.totalorder %s20, 0
      %p106 = por %p104, %p105
      %p107 = scmp.ne.s32.totalorder %s96, %s99
      %p108 = scmp.eq.s32.totalorder %s25, 1
      %p109 = por %p107, %p108
      %p110 = scmp.ne.s32.totalorder %s99, %s100
      %p111 = scmp.eq.s32.totalorder %s25, 0
      %p112 = por %p110, %p111
      %p113 = scmp.ne.s32.totalorder %s99, %s100
      %p114 = scmp.eq.s32.totalorder %s26, 1
      %p115 = por %p113, %p114
      %p117 = scmp.ne.s32.totalorder %s100, %s116
      %p118 = scmp.eq.s32.totalorder %s26, 0
      %p119 = por %p117, %p118
      %s120 = ssub.s32 %s27, %s39
      %s121 = ssub.s32 %s28, %s35
      %s122 = sor.u32 %s120, %s121
      %p123 = scmp.eq.s32.totalorder %s122, 0
      %s125 = sadd.s32 %s124, 1
      %s126 = scalar_select %p123, %s124, %s125
      %p129 = pneg %p123
      %p130 = scmp.eq.s32.totalorder %s20, 1
      %p131 = por %p129, %p130
      %p132 = scmp.ne.s32.totalorder %s124, %s127
      %p133 = scmp.eq.s32.totalorder %s20, 0
      %p134 = por %p132, %p133
      %p135 = scmp.ne.s32.totalorder %s124, %s127
      %p136 = scmp.eq.s32.totalorder %s25, 1
      %p137 = por %p135, %p136
      %p138 = scmp.ne.s32.totalorder %s127, %s128
      %p139 = scmp.eq.s32.totalorder %s25, 0
      %p140 = por %p138, %p139
      %p141 = scmp.ne.s32.totalorder %s127, %s128
      %p142 = scmp.eq.s32.totalorder %s26, 1
      %p143 = por %p141, %p142
      %p145 = scmp.ne.s32.totalorder %s128, %s144
      %p146 = scmp.eq.s32.totalorder %s26, 0
      %p147 = por %p145, %p146
      %p148 = scmp.le.s32.totalorder 1, %s20
      %p149 = scmp.lt.s32.totalorder %s20, 3
      %p150 = pnand %p148, %p149
      %p151 = pneg %p150
      // Predicated region
      $region9: #{_lambda_.2} parent=5 // pred_check
        _
      $region10: #{_lambda_.2} parent=5 // pred_check_branch
        %153 = sbr.rel (%p150) target = $region12
      $region11: #{_lambda_.2} parent=5 // pred_region
        %s154 = ssub.s32 %s20, 1
        // Predicated region
        $region13: #{_lambda_.2} parent=11 // pred_check
          %p155 = pneg %p84
        $region14: #{_lambda_.2} parent=11 // pred_check_branch
          %157 = sbr.rel (%p155) target = $region16
        $region15: #{_lambda_.2} parent=11 // pred_region
          %s159 = ssub.s32 1024, 1024
          %160 = vsyncadd [#allocation6], %s159
          %s161 = smul.addr %s30, 64
          %s162 = scalar_lea.hbm %s1, %s161
          %s163 = sshll.u32 [#allocation5], 4
          %s164 = int_to_ptr.vmem [resolvable:$true] %s163
          %169 = dma.hbm_to_vmem [thread:$0]  %s162, 1024, %s164, [#allocation6], 64, 64, 4
        $region16: #{_lambda_.2} parent=11 // pred_fallthru
          _
      $region12: #{_lambda_.2} parent=5 // pred_fallthru
        _
      %p170 = scmp.lt.s32.totalorder %s20, 2
      // Predicated region
      $region17: #{_lambda_.2} parent=5 // pred_check
        %p171 = pneg %p170
      $region18: #{_lambda_.2} parent=5 // pred_check_branch
        %173 = sbr.rel (%p171) target = $region20
      $region19: #{_lambda_.2} parent=5 // pred_region
        // Predicated region
        $region21: #{_lambda_.2} parent=19 // pred_check
          %p174 = pneg %p52
        $region22: #{_lambda_.2} parent=19 // pred_check_branch
          %176 = sbr.rel (%p174) target = $region24
        $region23: #{_lambda_.2} parent=19 // pred_region
          %s177 = sand.u32 %s42, 1
          %s178 = scalar_lea.sflag [#allocation3], %s177
          %s179 = sand.u32 %s42, 1
          %s180 = smul.addr %s179, 128
          %s181 = scalar_lea.vmem [#allocation2], %s180
          %s182 = smul.u32 32, %s27
          %s184 = ssub.s32 2048, 2048
          %185 = vsyncadd %s178, %s184
          %s186 = smul.addr %s182, 64
          %s187 = scalar_lea.hbm %s0, %s186
          %s188 = sshll.u32 %s181, 4
          %s189 = int_to_ptr.vmem [resolvable:$true] %s188
          %194 = dma.hbm_to_vmem [thread:$0]  %s187, 2048, %s189, %s178, 64, 64, 4
        $region24: #{_lambda_.2} parent=19 // pred_fallthru
          _
      $region20: #{_lambda_.2} parent=5 // pred_fallthru
        _
      %p195 = scmp.le.s32.totalorder 1, %s20
      %p196 = scmp.lt.s32.totalorder %s20, 3
      %p197 = pnand %p195, %p196
      %p198 = pneg %p197
      // Predicated region
      $region25: #{_lambda_.2} parent=5 // pred_check
        _
      $region26: #{_lambda_.2} parent=5 // pred_check_branch
        %200 = sbr.rel (%p197) target = $region28
      $region27: #{_lambda_.2} parent=5 // pred_region
        %s201 = ssub.s32 %s20, 1
        %s202 = sand.u32 %s45, 1
        %s203 = scalar_lea.sflag [#allocation3], %s202
        %s204 = sand.u32 %s45, 1
        %s205 = smul.addr %s204, 128
        %s206 = scalar_lea.vmem [#allocation2], %s205
        // Predicated region
        $region29: #{_lambda_.2} parent=27 // pred_check
          %p207 = pneg %p58
        $region30: #{_lambda_.2} parent=27 // pred_check_branch
          %209 = sbr.rel (%p207) target = $region32
        $region31: #{_lambda_.2} parent=27 // pred_region
          %210 = dma.done %s203, 2048
        $region32: #{_lambda_.2} parent=27 // pred_fallthru
          _
        // Predicated region
        $region33: #{_lambda_.2} parent=27 // pred_check
          %p211 = pneg %p84
        $region34: #{_lambda_.2} parent=27 // pred_check_branch
          %213 = sbr.rel (%p211) target = $region36
        $region35: #{_lambda_.2} parent=27 // pred_region
          %214 = dma.done [#allocation6], 1024
        $region36: #{_lambda_.2} parent=27 // pred_fallthru
          _
        %s215 = sand.u32 %s45, 1
        %s216 = scalar_lea.sflag [#allocation3], %s215
        %s217 = sand.u32 %s45, 1
        %s218 = smul.addr %s217, 128
        %s219 = scalar_lea.vmem [#allocation2], %s218
        %p220 = pneg %p58
        %p221 = pneg %p55
        %p222 = pneg %p84
        %p223 = pneg %p81
        %p224 = pneg %p112
        %p225 = pneg %p109
        %s226 = sand.u32 %s99, 1
        %s227 = scalar_lea.sflag [#allocation4], %s226
        %s228 = sand.u32 %s99, 1
        %s229 = smul.addr %s228, 128
        %s230 = scalar_lea.vmem [#allocation7], %s229
        %p231 = pneg %p140
        %p232 = pneg %p137
        %s233 = sand.u32 %s127, 1
        %s234 = scalar_lea.sflag [#allocation9], %s233
        %s235 = sand.u32 %s127, 1
        %s236 = smul.addr %s235, 2
        %s237 = scalar_lea.vmem [#allocation8], %s236
        %s238 = smul.u32 32, %s29
        %s239 = smul.u32 32, %s29
        %v241 = vld [vmem:[%s206] sm:$0xf]
        %v242 = vld [vmem:[%s206 + $0x4] sm:$0xf]
        %v243 = vld [vmem:[%s206 + $0x8] sm:$0xf]
        %v244 = vld [vmem:[%s206 + $0xc] sm:$0xf]
        %v245 = vld [vmem:[%s206 + $0x10] sm:$0xf]
        %v246 = vld [vmem:[%s206 + $0x14] sm:$0xf]
        %v247 = vld [vmem:[%s206 + $0x18] sm:$0xf]
        %v248 = vld [vmem:[%s206 + $0x1c] sm:$0xf]
        %v249 = vld [vmem:[%s206 + $0x20] sm:$0xf]
        %v250 = vld [vmem:[%s206 + $0x24] sm:$0xf]
        %v251 = vld [vmem:[%s206 + $0x28] sm:$0xf]
        %v252 = vld [vmem:[%s206 + $0x2c] sm:$0xf]
        %v253 = vld [vmem:[%s206 + $0x30] sm:$0xf]
        %v254 = vld [vmem:[%s206 + $0x34] sm:$0xf]
        %v255 = vld [vmem:[%s206 + $0x38] sm:$0xf]
        %v256 = vld [vmem:[%s206 + $0x3c] sm:$0xf]
        %v257 = vld [vmem:[%s206 + $0x40] sm:$0xf]
        %v258 = vld [vmem:[%s206 + $0x44] sm:$0xf]
        %v259 = vld [vmem:[%s206 + $0x48] sm:$0xf]
        %v260 = vld [vmem:[%s206 + $0x4c] sm:$0xf]
        %v261 = vld [vmem:[%s206 + $0x50] sm:$0xf]
        %v262 = vld [vmem:[%s206 + $0x54] sm:$0xf]
        %v263 = vld [vmem:[%s206 + $0x58] sm:$0xf]
        %v264 = vld [vmem:[%s206 + $0x5c] sm:$0xf]
        %v265 = vld [vmem:[%s206 + $0x60] sm:$0xf]
        %v266 = vld [vmem:[%s206 + $0x64] sm:$0xf]
        %v267 = vld [vmem:[%s206 + $0x68] sm:$0xf]
        %v268 = vld [vmem:[%s206 + $0x6c] sm:$0xf]
        %v269 = vld [vmem:[%s206 + $0x70] sm:$0xf]
        %v270 = vld [vmem:[%s206 + $0x74] sm:$0xf]
        %v271 = vld [vmem:[%s206 + $0x78] sm:$0xf]
        %v272 = vld [vmem:[%s206 + $0x7c] sm:$0xf]
        %v273 = vld [vmem:[#allocation5] sm:$0xf]
        %v274 = vld [vmem:[#allocation5 + $0x4] sm:$0xf]
        %v275 = vld [vmem:[#allocation5 + $0x8] sm:$0xf]
        %v276 = vld [vmem:[#allocation5 + $0xc] sm:$0xf]
        %v277 = vld [vmem:[#allocation5 + $0x10] sm:$0xf]
        %v278 = vld [vmem:[#allocation5 + $0x14] sm:$0xf]
        %v279 = vld [vmem:[#allocation5 + $0x18] sm:$0xf]
        %v280 = vld [vmem:[#allocation5 + $0x1c] sm:$0xf]
        %v281 = vld [vmem:[#allocation5 + $0x20] sm:$0xf]
        %v282 = vld [vmem:[#allocation5 + $0x24] sm:$0xf]
        %v283 = vld [vmem:[#allocation5 + $0x28] sm:$0xf]
        %v284 = vld [vmem:[#allocation5 + $0x2c] sm:$0xf]
        %v285 = vld [vmem:[#allocation5 + $0x30] sm:$0xf]
        %v286 = vld [vmem:[#allocation5 + $0x34] sm:$0xf]
        %v287 = vld [vmem:[#allocation5 + $0x38] sm:$0xf]
        %v288 = vld [vmem:[#allocation5 + $0x3c] sm:$0xf]
        %v321 = vunpack.c.l.b16 %v241
        %v322 = vunpack.c.l.b16 %v242
        %v323 = vunpack.c.l.b16 %v243
        %v324 = vunpack.c.l.b16 %v244
        %v325 = vunpack.c.l.b16 %v245
        %v326 = vunpack.c.l.b16 %v246
        %v327 = vunpack.c.l.b16 %v247
        %v328 = vunpack.c.l.b16 %v248
        %v329 = vunpack.c.l.b16 %v249
        %v330 = vunpack.c.l.b16 %v250
        %v331 = vunpack.c.l.b16 %v251
        %v332 = vunpack.c.l.b16 %v252
        %v333 = vunpack.c.l.b16 %v253
        %v334 = vunpack.c.l.b16 %v254
        %v335 = vunpack.c.l.b16 %v255
        %v336 = vunpack.c.l.b16 %v256
        %v337 = vunpack.c.l.b16 %v257
        %v338 = vunpack.c.l.b16 %v258
        %v339 = vunpack.c.l.b16 %v259
        %v340 = vunpack.c.l.b16 %v260
        %v341 = vunpack.c.l.b16 %v261
        %v342 = vunpack.c.l.b16 %v262
        %v343 = vunpack.c.l.b16 %v263
        %v344 = vunpack.c.l.b16 %v264
        %v345 = vunpack.c.l.b16 %v265
        %v346 = vunpack.c.l.b16 %v266
        %v347 = vunpack.c.l.b16 %v267
        %v348 = vunpack.c.l.b16 %v268
        %v349 = vunpack.c.l.b16 %v269
        %v350 = vunpack.c.l.b16 %v270
        %v351 = vunpack.c.l.b16 %v271
        %v352 = vunpack.c.l.b16 %v272
        %v353 = vpack.c.b16 %v322, %v321
        %v354 = vpack.c.b16 %v324, %v323
        %v355 = vpack.c.b16 %v326, %v325
        %v356 = vpack.c.b16 %v328, %v327
        %v357 = vpack.c.b16 %v330, %v329
        %v358 = vpack.c.b16 %v332, %v331
        %v359 = vpack.c.b16 %v334, %v333
        %v360 = vpack.c.b16 %v336, %v335
        %v361 = vpack.c.b16 %v338, %v337
        %v362 = vpack.c.b16 %v340, %v339
        %v363 = vpack.c.b16 %v342, %v341
        %v364 = vpack.c.b16 %v344, %v343
        %v365 = vpack.c.b16 %v346, %v345
        %v366 = vpack.c.b16 %v348, %v347
        %v367 = vpack.c.b16 %v350, %v349
        %v368 = vpack.c.b16 %v352, %v351
        %v401 = vunpack.c.l.b16 %v273
        %v402 = vunpack.c.l.b16 %v274
        %v403 = vunpack.c.l.b16 %v275
        %v404 = vunpack.c.l.b16 %v276
        %v405 = vunpack.c.l.b16 %v277
        %v406 = vunpack.c.l.b16 %v278
        %v407 = vunpack.c.l.b16 %v279
        %v408 = vunpack.c.l.b16 %v280
        %v409 = vunpack.c.l.b16 %v281
        %v410 = vunpack.c.l.b16 %v282
        %v411 = vunpack.c.l.b16 %v283
        %v412 = vunpack.c.l.b16 %v284
        %v413 = vunpack.c.l.b16 %v285
        %v414 = vunpack.c.l.b16 %v286
        %v415 = vunpack.c.l.b16 %v287
        %v416 = vunpack.c.l.b16 %v288
        %v417 = vpack.c.b16 %v402, %v401
        %v418 = vpack.c.b16 %v404, %v403
        %v419 = vpack.c.b16 %v406, %v405
        %v420 = vpack.c.b16 %v408, %v407
        %v421 = vpack.c.b16 %v410, %v409
        %v422 = vpack.c.b16 %v412, %v411
        %v423 = vpack.c.b16 %v414, %v413
        %v424 = vpack.c.b16 %v416, %v415
        %433 = vmatprep.subr.bf16.mxu0 0
        %434 = vmatpush1.bf16.msra.mxu0 %v417
        %435 = vmatprep.subr.bf16.mxu0 0
        %436 = vmatpush1.bf16.msra.mxu0 %v418
        %437 = vmatprep.subr.bf16.mxu0 0
        %438 = vmatpush1.bf16.msra.mxu0 %v419
        %439 = vmatprep.subr.bf16.mxu0 0
        %440 = vmatpush1.bf16.msra.mxu0 %v420
        %441 = vmatprep.subr.bf16.mxu0 0
        %442 = vmatpush1.bf16.msra.mxu0 %v421
        %443 = vmatprep.subr.bf16.mxu0 0
        %444 = vmatpush1.bf16.msra.mxu0 %v422
        %445 = vmatprep.subr.bf16.mxu0 0
        %446 = vmatpush1.bf16.msra.mxu0 %v423
        %447 = vmatprep.subr.bf16.mxu0 0
        %448 = vmatpush1.bf16.msra.mxu0 %v424
        %449 = vmatprep.subr.bf16.mxu0 0
        %450 = vmatpush1.bf16.msra.mxu0 0
        %451 = vmatprep.subr.bf16.mxu0 0
        %452 = vmatpush1.bf16.msra.mxu0 0
        %453 = vmatprep.subr.bf16.mxu0 0
        %454 = vmatpush1.bf16.msra.mxu0 0
        %455 = vmatprep.subr.bf16.mxu0 0
        %456 = vmatpush1.bf16.msra.mxu0 0
        %457 = vmatprep.subr.bf16.mxu0 0
        %458 = vmatpush1.bf16.msra.mxu0 0
        %459 = vmatprep.subr.bf16.mxu0 0
        %460 = vmatpush1.bf16.msra.mxu0 0
        %461 = vmatprep.subr.bf16.mxu0 0
        %462 = vmatpush1.bf16.msra.mxu0 0
        %463 = vmatprep.subr.bf16.mxu0 0
        %464 = vmatpush1.bf16.msra.mxu0 0
        %465 = vmatprep.mubr.bf16.mxu0 0
        %466 = vmatmul.mubr.bf16.gmra.mrb[0].mxu0 %v353
        %v467 = vpop.f32.mrb[0].mxu0
        %v468 = vadd.f32 0.0, %v467
        %v469 = vpop.f32.mrb[0].mxu0
        %v470 = vpop.f32.mrb[0].mxu0
        %v471 = vadd.f32 0.0, %v470
        %v472 = vpop.f32.mrb[0].mxu0
        %473 = vmatprep.mubr.bf16.mxu0 0
        %474 = vmatmul.mubr.bf16.gmra.mrb[0].mxu0 %v354
        %v475 = vpop.f32.mrb[0].mxu0
        %v476 = vadd.f32 0.0, %v475
        %v477 = vpop.f32.mrb[0].mxu0
        %v478 = vpop.f32.mrb[0].mxu0
        %v479 = vadd.f32 0.0, %v478
        %v480 = vpop.f32.mrb[0].mxu0
        %481 = vmatprep.mubr.bf16.mxu0 0
        %482 = vmatmul.mubr.bf16.gmra.mrb[0].mxu0 %v355
        %v483 = vpop.f32.mrb[0].mxu0
        %v484 = vadd.f32 0.0, %v483
        %v485 = vpop.f32.mrb[0].mxu0
        %v486 = vpop.f32.mrb[0].mxu0
        %v487 = vadd.f32 0.0, %v486
        %v488 = vpop.f32.mrb[0].mxu0
        %489 = vmatprep.mubr.bf16.mxu0 0
        %490 = vmatmul.mubr.bf16.gmra.mrb[0].mxu0 %v356
        %v491 = vpop.f32.mrb[0].mxu0
        %v492 = vadd.f32 0.0, %v491
        %v493 = vpop.f32.mrb[0].mxu0
        %v494 = vpop.f32.mrb[0].mxu0
        %v495 = vadd.f32 0.0, %v494
        %v496 = vpop.f32.mrb[0].mxu0
        %497 = vmatprep.mubr.bf16.mxu0 0
        %498 = vmatmul.mubr.bf16.gmra.mrb[0].mxu0 %v357
        %v499 = vpop.f32.mrb[0].mxu0
        %v500 = vadd.f32 0.0, %v499
        %v501 = vpop.f32.mrb[0].mxu0
        %v502 = vpop.f32.mrb[0].mxu0
        %v503 = vadd.f32 0.0, %v502
        %v504 = vpop.f32.mrb[0].mxu0
        %505 = vmatprep.mubr.bf16.mxu0 0
        %506 = vmatmul.mubr.bf16.gmra.mrb[0].mxu0 %v358
        %v507 = vpop.f32.mrb[0].mxu0
        %v508 = vadd.f32 0.0, %v507
        %v509 = vpop.f32.mrb[0].mxu0
        %v510 = vpop.f32.mrb[0].mxu0
        %v511 = vadd.f32 0.0, %v510
        %v512 = vpop.f32.mrb[0].mxu0
        %513 = vmatprep.mubr.bf16.mxu0 0
        %514 = vmatmul.mubr.bf16.gmra.mrb[0].mxu0 %v359
        %v515 = vpop.f32.mrb[0].mxu0
        %v516 = vadd.f32 0.0, %v515
        %v517 = vpop.f32.mrb[0].mxu0
        %v518 = vpop.f32.mrb[0].mxu0
        %v519 = vadd.f32 0.0, %v518
        %v520 = vpop.f32.mrb[0].mxu0
        %521 = vmatprep.mubr.bf16.mxu0 0
        %522 = vmatmul.mubr.bf16.gmra.mrb[0].mxu0 %v360
        %v523 = vpop.f32.mrb[0].mxu0
        %v524 = vadd.f32 0.0, %v523
        %v525 = vpop.f32.mrb[0].mxu0
        %v526 = vpop.f32.mrb[0].mxu0
        %v527 = vadd.f32 0.0, %v526
        %v528 = vpop.f32.mrb[0].mxu0
        %529 = vmatprep.mubr.bf16.mxu0 0
        %530 = vmatmul.mubr.bf16.gmra.mrb[0].mxu0 %v361
        %v531 = vpop.f32.mrb[0].mxu0
        %v532 = vadd.f32 0.0, %v531
        %v533 = vpop.f32.mrb[0].mxu0
        %v534 = vpop.f32.mrb[0].mxu0
        %v535 = vadd.f32 0.0, %v534
        %v536 = vpop.f32.mrb[0].mxu0
        %537 = vmatprep.mubr.bf16.mxu0 0
        %538 = vmatmul.mubr.bf16.gmra.mrb[0].mxu0 %v362
        %v539 = vpop.f32.mrb[0].mxu0
        %v540 = vadd.f32 0.0, %v539
        %v541 = vpop.f32.mrb[0].mxu0
        %v542 = vpop.f32.mrb[0].mxu0
        %v543 = vadd.f32 0.0, %v542
        %v544 = vpop.f32.mrb[0].mxu0
        %545 = vmatprep.mubr.bf16.mxu0 0
        %546 = vmatmul.mubr.bf16.gmra.mrb[0].mxu0 %v363
        %v547 = vpop.f32.mrb[0].mxu0
        %v548 = vadd.f32 0.0, %v547
        %v549 = vpop.f32.mrb[0].mxu0
        %v550 = vpop.f32.mrb[0].mxu0
        %v551 = vadd.f32 0.0, %v550
        %v552 = vpop.f32.mrb[0].mxu0
        %553 = vmatprep.mubr.bf16.mxu0 0
        %554 = vmatmul.mubr.bf16.gmra.mrb[0].mxu0 %v364
        %v555 = vpop.f32.mrb[0].mxu0
        %v556 = vadd.f32 0.0, %v555
        %v557 = vpop.f32.mrb[0].mxu0
        %v558 = vpop.f32.mrb[0].mxu0
        %v559 = vadd.f32 0.0, %v558
        %v560 = vpop.f32.mrb[0].mxu0
        %561 = vmatprep.mubr.bf16.mxu0 0
        %562 = vmatmul.mubr.bf16.gmra.mrb[0].mxu0 %v365
        %v563 = vpop.f32.mrb[0].mxu0
        %v564 = vadd.f32 0.0, %v563
        %v565 = vpop.f32.mrb[0].mxu0
        %v566 = vpop.f32.mrb[0].mxu0
        %v567 = vadd.f32 0.0, %v566
        %v568 = vpop.f32.mrb[0].mxu0
        %569 = vmatprep.mubr.bf16.mxu0 0
        %570 = vmatmul.mubr.bf16.gmra.mrb[0].mxu0 %v366
        %v571 = vpop.f32.mrb[0].mxu0
        %v572 = vadd.f32 0.0, %v571
        %v573 = vpop.f32.mrb[0].mxu0
        %v574 = vpop.f32.mrb[0].mxu0
        %v575 = vadd.f32 0.0, %v574
        %v576 = vpop.f32.mrb[0].mxu0
        %577 = vmatprep.mubr.bf16.mxu0 0
        %578 = vmatmul.mubr.bf16.gmra.mrb[0].mxu0 %v367
        %v579 = vpop.f32.mrb[0].mxu0
        %v580 = vadd.f32 0.0, %v579
        %v581 = vpop.f32.mrb[0].mxu0
        %v582 = vpop.f32.mrb[0].mxu0
        %v583 = vadd.f32 0.0, %v582
        %v584 = vpop.f32.mrb[0].mxu0
        %585 = vmatprep.mubr.bf16.mxu0 0
        %586 = vmatmul.mubr.bf16.gmra.mrb[0].mxu0 %v368
        %v587 = vpop.f32.mrb[0].mxu0
        %v588 = vadd.f32 0.0, %v587
        %v589 = vpop.f32.mrb[0].mxu0
        %v590 = vpop.f32.mrb[0].mxu0
        %v591 = vadd.f32 0.0, %v590
        %v592 = vpop.f32.mrb[0].mxu0
        %593 = vdwg.mxu0
        %v594 = vpack.c.bf16 %v471, %v468
        %v595 = vpack.c.bf16 %v479, %v476
        %v596 = vpack.c.bf16 %v487, %v484
        %v597 = vpack.c.bf16 %v495, %v492
        %v598 = vpack.c.bf16 %v503, %v500
        %v599 = vpack.c.bf16 %v511, %v508
        %v600 = vpack.c.bf16 %v519, %v516
        %v601 = vpack.c.bf16 %v527, %v524
        %v602 = vpack.c.bf16 %v535, %v532
        %v603 = vpack.c.bf16 %v543, %v540
        %v604 = vpack.c.bf16 %v551, %v548
        %v605 = vpack.c.bf16 %v559, %v556
        %v606 = vpack.c.bf16 %v567, %v564
        %v607 = vpack.c.bf16 %v575, %v572
        %v608 = vpack.c.bf16 %v583, %v580
        %v609 = vpack.c.bf16 %v591, %v588
        %v626 = vunpack.c.l.b16 %v594
        %v627 = vunpack.c.h.b16 %v594
        %v628 = vunpack.c.l.b16 %v595
        %v629 = vunpack.c.h.b16 %v595
        %v630 = vunpack.c.l.b16 %v596
        %v631 = vunpack.c.h.b16 %v596
        %v632 = vunpack.c.l.b16 %v597
        %v633 = vunpack.c.h.b16 %v597
        %v634 = vunpack.c.l.b16 %v598
        %v635 = vunpack.c.h.b16 %v598
        %v636 = vunpack.c.l.b16 %v599
        %v637 = vunpack.c.h.b16 %v599
        %v638 = vunpack.c.l.b16 %v600
        %v639 = vunpack.c.h.b16 %v600
        %v640 = vunpack.c.l.b16 %v601
        %v641 = vunpack.c.h.b16 %v601
        %v642 = vunpack.c.l.b16 %v602
        %v643 = vunpack.c.h.b16 %v602
        %v644 = vunpack.c.l.b16 %v603
        %v645 = vunpack.c.h.b16 %v603
        %v646 = vunpack.c.l.b16 %v604
        %v647 = vunpack.c.h.b16 %v604
        %v648 = vunpack.c.l.b16 %v605
        %v649 = vunpack.c.h.b16 %v605
        %v650 = vunpack.c.l.b16 %v606
        %v651 = vunpack.c.h.b16 %v606
        %v652 = vunpack.c.l.b16 %v607
        %v653 = vunpack.c.h.b16 %v607
        %v654 = vunpack.c.l.b16 %v608
        %v655 = vunpack.c.h.b16 %v608
        %v656 = vunpack.c.l.b16 %v609
        %v657 = vunpack.c.h.b16 %v609
        %v658 = vpack.c.b16 %v626, %v626
        %v659 = vpack.c.b16 %v627, %v627
        %v660 = vpack.c.b16 %v628, %v628
        %v661 = vpack.c.b16 %v629, %v629
        %v662 = vpack.c.b16 %v630, %v630
        %v663 = vpack.c.b16 %v631, %v631
        %v664 = vpack.c.b16 %v632, %v632
        %v665 = vpack.c.b16 %v633, %v633
        %v666 = vpack.c.b16 %v634, %v634
        %v667 = vpack.c.b16 %v635, %v635
        %v668 = vpack.c.b16 %v636, %v636
        %v669 = vpack.c.b16 %v637, %v637
        %v670 = vpack.c.b16 %v638, %v638
        %v671 = vpack.c.b16 %v639, %v639
        %v672 = vpack.c.b16 %v640, %v640
        %v673 = vpack.c.b16 %v641, %v641
        %v674 = vpack.c.b16 %v642, %v642
        %v675 = vpack.c.b16 %v643, %v643
        %v676 = vpack.c.b16 %v644, %v644
        %v677 = vpack.c.b16 %v645, %v645
        %v678 = vpack.c.b16 %v646, %v646
        %v679 = vpack.c.b16 %v647, %v647
        %v680 = vpack.c.b16 %v648, %v648
        %v681 = vpack.c.b16 %v649, %v649
        %v682 = vpack.c.b16 %v650, %v650
        %v683 = vpack.c.b16 %v651, %v651
        %v684 = vpack.c.b16 %v652, %v652
        %v685 = vpack.c.b16 %v653, %v653
        %v686 = vpack.c.b16 %v654, %v654
        %v687 = vpack.c.b16 %v655, %v655
        %v688 = vpack.c.b16 %v656, %v656
        %v689 = vpack.c.b16 %v657, %v657
        %vm722 = vcmask 60416
        %723 = vst.msk [vmem:[%s230] sm:$0xf] %vm722, %v658
        %724 = vst.msk [vmem:[%s230 + $0x4] sm:$0xf] %vm722, %v659
        %725 = vst.msk [vmem:[%s230 + $0x8] sm:$0xf] %vm722, %v660
        %726 = vst.msk [vmem:[%s230 + $0xc] sm:$0xf] %vm722, %v661
        %727 = vst.msk [vmem:[%s230 + $0x10] sm:$0xf] %vm722, %v662
        %728 = vst.msk [vmem:[%s230 + $0x14] sm:$0xf] %vm722, %v663
        %729 = vst.msk [vmem:[%s230 + $0x18] sm:$0xf] %vm722, %v664
        %730 = vst.msk [vmem:[%s230 + $0x1c] sm:$0xf] %vm722, %v665
        %731 = vst.msk [vmem:[%s230 + $0x20] sm:$0xf] %vm722, %v666
        %732 = vst.msk [vmem:[%s230 + $0x24] sm:$0xf] %vm722, %v667
        %733 = vst.msk [vmem:[%s230 + $0x28] sm:$0xf] %vm722, %v668
        %734 = vst.msk [vmem:[%s230 + $0x2c] sm:$0xf] %vm722, %v669
        %735 = vst.msk [vmem:[%s230 + $0x30] sm:$0xf] %vm722, %v670
        %736 = vst.msk [vmem:[%s230 + $0x34] sm:$0xf] %vm722, %v671
        %737 = vst.msk [vmem:[%s230 + $0x38] sm:$0xf] %vm722, %v672
        %738 = vst.msk [vmem:[%s230 + $0x3c] sm:$0xf] %vm722, %v673
        %739 = vst.msk [vmem:[%s230 + $0x40] sm:$0xf] %vm722, %v674
        %740 = vst.msk [vmem:[%s230 + $0x44] sm:$0xf] %vm722, %v675
        %741 = vst.msk [vmem:[%s230 + $0x48] sm:$0xf] %vm722, %v676
        %742 = vst.msk [vmem:[%s230 + $0x4c] sm:$0xf] %vm722, %v677
        %743 = vst.msk [vmem:[%s230 + $0x50] sm:$0xf] %vm722, %v678
        %744 = vst.msk [vmem:[%s230 + $0x54] sm:$0xf] %vm722, %v679
        %745 = vst.msk [vmem:[%s230 + $0x58] sm:$0xf] %vm722, %v680
        %746 = vst.msk [vmem:[%s230 + $0x5c] sm:$0xf] %vm722, %v681
        %747 = vst.msk [vmem:[%s230 + $0x60] sm:$0xf] %vm722, %v682
        %748 = vst.msk [vmem:[%s230 + $0x64] sm:$0xf] %vm722, %v683
        %749 = vst.msk [vmem:[%s230 + $0x68] sm:$0xf] %vm722, %v684
        %750 = vst.msk [vmem:[%s230 + $0x6c] sm:$0xf] %vm722, %v685
        %751 = vst.msk [vmem:[%s230 + $0x70] sm:$0xf] %vm722, %v686
        %752 = vst.msk [vmem:[%s230 + $0x74] sm:$0xf] %vm722, %v687
        %753 = vst.msk [vmem:[%s230 + $0x78] sm:$0xf] %vm722, %v688
        %754 = vst.msk [vmem:[%s230 + $0x7c] sm:$0xf] %vm722, %v689
        %vm755 = vcmask 64512
        %v756 = vsel %vm755, %v468, 0.0
        %v757 = vsel %vm755, %v471, 0.0
        %v758 = vadd.f32 %v756, %v757
        %v759 = vsel %vm755, %v476, 0.0
        %v760 = vadd.f32 %v758, %v759
        %v761 = vsel %vm755, %v479, 0.0
        %v762 = vadd.f32 %v760, %v761
        %v763 = vsel %vm755, %v484, 0.0
        %v764 = vadd.f32 %v762, %v763
        %v765 = vsel %vm755, %v487, 0.0
        %v766 = vadd.f32 %v764, %v765
        %v767 = vsel %vm755, %v492, 0.0
        %v768 = vadd.f32 %v766, %v767
        %v769 = vsel %vm755, %v495, 0.0
        %v770 = vadd.f32 %v768, %v769
        %v771 = vsel %vm755, %v500, 0.0
        %v772 = vadd.f32 %v770, %v771
        %v773 = vsel %vm755, %v503, 0.0
        %v774 = vadd.f32 %v772, %v773
        %v775 = vsel %vm755, %v508, 0.0
        %v776 = vadd.f32 %v774, %v775
        %v777 = vsel %vm755, %v511, 0.0
        %v778 = vadd.f32 %v776, %v777
        %v779 = vsel %vm755, %v516, 0.0
        %v780 = vadd.f32 %v778, %v779
        %v781 = vsel %vm755, %v519, 0.0
        %v782 = vadd.f32 %v780, %v781
        %v783 = vsel %vm755, %v524, 0.0
        %v784 = vadd.f32 %v782, %v783
        %v785 = vsel %vm755, %v527, 0.0
        %v786 = vadd.f32 %v784, %v785
        %v787 = vsel %vm755, %v532, 0.0
        %v788 = vadd.f32 %v786, %v787
        %v789 = vsel %vm755, %v535, 0.0
        %v790 = vadd.f32 %v788, %v789
        %v791 = vsel %vm755, %v540, 0.0
        %v792 = vadd.f32 %v790, %v791
        %v793 = vsel %vm755, %v543, 0.0
        %v794 = vadd.f32 %v792, %v793
        %v795 = vsel %vm755, %v548, 0.0
        %v796 = vadd.f32 %v794, %v795
        %v797 = vsel %vm755, %v551, 0.0
        %v798 = vadd.f32 %v796, %v797
        %v799 = vsel %vm755, %v556, 0.0
        %v800 = vadd.f32 %v798, %v799
        %v801 = vsel %vm755, %v559, 0.0
        %v802 = vadd.f32 %v800, %v801
        %v803 = vsel %vm755, %v564, 0.0
        %v804 = vadd.f32 %v802, %v803
        %v805 = vsel %vm755, %v567, 0.0
        %v806 = vadd.f32 %v804, %v805
        %v807 = vsel %vm755, %v572, 0.0
        %v808 = vadd.f32 %v806, %v807
        %v809 = vsel %vm755, %v575, 0.0
        %v810 = vadd.f32 %v808, %v809
        %v811 = vsel %vm755, %v580, 0.0
        %v812 = vadd.f32 %v810, %v811
        %v813 = vsel %vm755, %v583, 0.0
        %v814 = vadd.f32 %v812, %v813
        %v815 = vsel %vm755, %v588, 0.0
        %v816 = vadd.f32 %v814, %v815
        %v817 = vsel %vm755, %v591, 0.0
        %v818 = vadd.f32 %v816, %v817
        %v819 = vrot.slane %v818, 4
        %v820 = vadd.f32 %v818, %v819
        %v821 = vrot.slane %v820, 2
        %v822 = vadd.f32 %v820, %v821
        %v823 = vrot.slane %v822, 1
        %v824 = vadd.f32 %v822, %v823
        %vm825 = vcmask 57344
        %826 = vst.msk [vmem:[%s237] sm:$0x1] %vm825, %v824
        %v827 = vmul.f32 %v468, %v468
        %v828 = vmul.f32 %v471, %v471
        %v829 = vmul.f32 %v476, %v476
        %v830 = vmul.f32 %v479, %v479
        %v831 = vmul.f32 %v484, %v484
        %v832 = vmul.f32 %v487, %v487
        %v833 = vmul.f32 %v492, %v492
        %v834 = vmul.f32 %v495, %v495
        %v835 = vmul.f32 %v500, %v500
        %v836 = vmul.f32 %v503, %v503
        %v837 = vmul.f32 %v508, %v508
        %v838 = vmul.f32 %v511, %v511
        %v839 = vmul.f32 %v516, %v516
        %v840 = vmul.f32 %v519, %v519
        %v841 = vmul.f32 %v524, %v524
        %v842 = vmul.f32 %v527, %v527
        %v843 = vmul.f32 %v532, %v532
        %v844 = vmul.f32 %v535, %v535
        %v845 = vmul.f32 %v540, %v540
        %v846 = vmul.f32 %v543, %v543
        %v847 = vmul.f32 %v548, %v548
        %v848 = vmul.f32 %v551, %v551
        %v849 = vmul.f32 %v556, %v556
        %v850 = vmul.f32 %v559, %v559
        %v851 = vmul.f32 %v564, %v564
        %v852 = vmul.f32 %v567, %v567
        %v853 = vmul.f32 %v572, %v572
        %v854 = vmul.f32 %v575, %v575
        %v855 = vmul.f32 %v580, %v580
        %v856 = vmul.f32 %v583, %v583
        %v857 = vmul.f32 %v588, %v588
        %v858 = vmul.f32 %v591, %v591
        %v859 = vsel %vm755, %v827, 0.0
        %v860 = vsel %vm755, %v828, 0.0
        %v861 = vadd.f32 %v859, %v860
        %v862 = vsel %vm755, %v829, 0.0
        %v863 = vadd.f32 %v861, %v862
        %v864 = vsel %vm755, %v830, 0.0
        %v865 = vadd.f32 %v863, %v864
        %v866 = vsel %vm755, %v831, 0.0
        %v867 = vadd.f32 %v865, %v866
        %v868 = vsel %vm755, %v832, 0.0
        %v869 = vadd.f32 %v867, %v868
        %v870 = vsel %vm755, %v833, 0.0
        %v871 = vadd.f32 %v869, %v870
        %v872 = vsel %vm755, %v834, 0.0
        %v873 = vadd.f32 %v871, %v872
        %v874 = vsel %vm755, %v835, 0.0
        %v875 = vadd.f32 %v873, %v874
        %v876 = vsel %vm755, %v836, 0.0
        %v877 = vadd.f32 %v875, %v876
        %v878 = vsel %vm755, %v837, 0.0
        %v879 = vadd.f32 %v877, %v878
        %v880 = vsel %vm755, %v838, 0.0
        %v881 = vadd.f32 %v879, %v880
        %v882 = vsel %vm755, %v839, 0.0
        %v883 = vadd.f32 %v881, %v882
        %v884 = vsel %vm755, %v840, 0.0
        %v885 = vadd.f32 %v883, %v884
        %v886 = vsel %vm755, %v841, 0.0
        %v887 = vadd.f32 %v885, %v886
        %v888 = vsel %vm755, %v842, 0.0
        %v889 = vadd.f32 %v887, %v888
        %v890 = vsel %vm755, %v843, 0.0
        %v891 = vadd.f32 %v889, %v890
        %v892 = vsel %vm755, %v844, 0.0
        %v893 = vadd.f32 %v891, %v892
        %v894 = vsel %vm755, %v845, 0.0
        %v895 = vadd.f32 %v893, %v894
        %v896 = vsel %vm755, %v846, 0.0
        %v897 = vadd.f32 %v895, %v896
        %v898 = vsel %vm755, %v847, 0.0
        %v899 = vadd.f32 %v897, %v898
        %v900 = vsel %vm755, %v848, 0.0
        %v901 = vadd.f32 %v899, %v900
        %v902 = vsel %vm755, %v849, 0.0
        %v903 = vadd.f32 %v901, %v902
        %v904 = vsel %vm755, %v850, 0.0
        %v905 = vadd.f32 %v903, %v904
        %v906 = vsel %vm755, %v851, 0.0
        %v907 = vadd.f32 %v905, %v906
        %v908 = vsel %vm755, %v852, 0.0
        %v909 = vadd.f32 %v907, %v908
        %v910 = vsel %vm755, %v853, 0.0
        %v911 = vadd.f32 %v909, %v910
        %v912 = vsel %vm755, %v854, 0.0
        %v913 = vadd.f32 %v911, %v912
        %v914 = vsel %vm755, %v855, 0.0
        %v915 = vadd.f32 %v913, %v914
        %v916 = vsel %vm755, %v856, 0.0
        %v917 = vadd.f32 %v915, %v916
        %v918 = vsel %vm755, %v857, 0.0
        %v919 = vadd.f32 %v917, %v918
        %v920 = vsel %vm755, %v858, 0.0
        %v921 = vadd.f32 %v919, %v920
        %v922 = vrot.slane %v921, 4
        %v923 = vadd.f32 %v921, %v922
        %v924 = vrot.slane %v923, 2
        %v925 = vadd.f32 %v923, %v924
        %v926 = vrot.slane %v925, 1
        %v927 = vadd.f32 %v925, %v926
        %928 = vst.msk [vmem:[%s237 + $0x1] sm:$0x1] %vm825, %v927
        %s929 = sand.u32 %s99, 1
        %s930 = scalar_lea.sflag [#allocation4], %s929
        %s931 = sand.u32 %s99, 1
        %s932 = smul.addr %s931, 128
        %s933 = scalar_lea.vmem [#allocation7], %s932
        %s934 = sand.u32 %s127, 1
        %s935 = scalar_lea.sflag [#allocation9], %s934
        %s936 = sand.u32 %s127, 1
        %s937 = smul.addr %s936, 2
        %s938 = scalar_lea.vmem [#allocation8], %s937
        // Predicated region
        $region37: #{_lambda_.2} parent=27 // pred_check
          %p939 = pneg %p109
        $region38: #{_lambda_.2} parent=27 // pred_check_branch
          %941 = sbr.rel (%p939) target = $region40
        $region39: #{_lambda_.2} parent=27 // pred_region
          %s942 = smul.u32 32, %s29
          %s944 = ssub.s32 2048, 2048
          %945 = vsyncadd %s930, %s944
          %s946 = sadd.s32 %s30, %s942
          %s947 = smul.addr %s946, 64
          %s948 = scalar_lea.hbm %s2, %s947
          %s949 = sshll.u32 %s933, 4
          %s950 = int_to_ptr.vmem [resolvable:$true] %s949
          %955 = dma.vmem_to_hbm [thread:$0]  %s950, 2048, %s948, %s930, 64, 64, 4
        $region40: #{_lambda_.2} parent=27 // pred_fallthru
          _
        // Predicated region
        $region41: #{_lambda_.2} parent=27 // pred_check
          %p956 = pneg %p137
        $region42: #{_lambda_.2} parent=27 // pred_check_branch
          %958 = sbr.rel (%p956) target = $region44
        $region43: #{_lambda_.2} parent=27 // pred_region
          %s960 = ssub.s32 32, 32
          %961 = vsyncadd %s935, %s960
          %s962 = sadd.s32 %s30, %s29
          %s963 = smul.addr %s962, 32
          %s964 = scalar_lea.hbm %s3, %s963
          %s966 = sshll.u32 %s938, 4
          %s967 = int_to_ptr.vmem [resolvable:$true] %s966
          %969 = dma.vmem_to_hbm [thread:$0]  %s967, 32, %s964, %s935
        $region44: #{_lambda_.2} parent=27 // pred_fallthru
          _
      $region28: #{_lambda_.2} parent=5 // pred_fallthru
        _
      %p970 = scmp.le.s32.totalorder 2, %s20
      // Predicated region
      $region45: #{_lambda_.2} parent=5 // pred_check
        %p971 = pneg %p970
      $region46: #{_lambda_.2} parent=5 // pred_check_branch
        %973 = sbr.rel (%p971) target = $region48
      $region47: #{_lambda_.2} parent=5 // pred_region
        %s974 = ssub.s32 %s20, 2
        // Predicated region
        $region49: #{_lambda_.2} parent=47 // pred_check
          %p975 = pneg %p115
        $region50: #{_lambda_.2} parent=47 // pred_check_branch
          %977 = sbr.rel (%p975) target = $region52
        $region51: #{_lambda_.2} parent=47 // pred_region
          %s978 = sand.u32 %s100, 1
          %s979 = scalar_lea.sflag [#allocation4], %s978
          %s980 = sand.u32 %s100, 1
          %s981 = smul.addr %s980, 128
          %s982 = scalar_lea.vmem [#allocation7], %s981
          %983 = dma.done %s979, 2048
        $region52: #{_lambda_.2} parent=47 // pred_fallthru
          _
        // Predicated region
        $region53: #{_lambda_.2} parent=47 // pred_check
          %p984 = pneg %p143
        $region54: #{_lambda_.2} parent=47 // pred_check_branch
          %986 = sbr.rel (%p984) target = $region56
        $region55: #{_lambda_.2} parent=47 // pred_region
          %s987 = sand.u32 %s128, 1
          %s988 = scalar_lea.sflag [#allocation9], %s987
          %s989 = sand.u32 %s128, 1
          %s990 = smul.addr %s989, 2
          %s991 = scalar_lea.vmem [#allocation8], %s990
          %992 = dma.done %s988, 32
        $region56: #{_lambda_.2} parent=47 // pred_fallthru
          _
      $region48: #{_lambda_.2} parent=5 // pred_fallthru
        _
    $region6: #{_lambda_.2} parent=1 // loop_footer
      %s24 = sadd.s32 1, %s20
    $region7: #{_lambda_.2} parent=1 // loop_footer_branch
      %19 = sbr.rel target = $region3
    $region8: #{_lambda_.2} parent=1 // loop_exit
      _
    %993 = vsyncpa [#allocation3], 1
    %s994 = scalar_lea.sflag [#allocation3], 1
    %995 = vsyncpa %s994, 1
    %996 = vsyncpa [#allocation6], 1
    %997 = vsyncpa [#allocation4], 1
    %s998 = scalar_lea.sflag [#allocation4], 1
    %999 = vsyncpa %s998, 1
    %1000 = vsyncpa [#allocation9], 1
    %s1001 = scalar_lea.sflag [#allocation9], 1
    %1002 = vsyncpa %s1001, 1

// kernel: _lambda_.3
$region0: #{_lambda_.3}
  #allocation0 [shape = 'u32[]', space=smem, size = 0x4, offset = 0x4, fixed_abs, tag = 'smem constant byte address 0x4 - core index']
  #allocation1 [shape = 'u32[144,128]{1,0:T(1,128)}', space=vmem, size = 0x12000, scoped, tag = 'internal scratch']
  %s0 = inlined_call_operand.hbm [shape: bf16[512,8], index: 0, kind: input, shape index: {}, may-alias: {0,3}]
  %s1 = inlined_call_operand.hbm [shape: f32[1,8], index: 1, kind: input, shape index: {}]
  %s2 = inlined_call_operand.hbm [shape: f32[1,8], index: 2, kind: input, shape index: {}]
  %s3 = inlined_call_operand.hbm [shape: bf16[512,8], index: 3, kind: output, shape index: {}, may-alias: {0,3}]
  %s4 = sld [smem:[#allocation0]]
  $region34: #{_lambda_.3} parent=0
    _
  %s6 = ssub.s32 1, %s4
  %s7 = scalar_select 0, %s6, %s4
  $region1: #{_lambda_.3} parent=0
    #allocation2 [shape = 'u8[131072]{0}', space=vmem, size = 0x20000, scoped, tag = 'input window, operand 0, single buffered']
    #allocation3 [shape = 's32[1]{0}', space=sflag, size = 0x4, scoped, tag = 'scoped memory for _lambda_.3']
    #allocation4 [shape = 's32[1]{0}', space=sflag, size = 0x4, scoped, tag = 'scoped memory for _lambda_.3']
    #allocation5 [shape = 'u8[512]{0}', space=vmem, size = 0x400, scoped, tag = 'input window, operand 1, single buffered']
    #allocation6 [shape = 's32[1]{0}', space=sflag, size = 0x4, scoped, tag = 'scoped memory for _lambda_.3']
    #allocation7 [shape = 'u8[512]{0}', space=vmem, size = 0x400, scoped, tag = 'input window, operand 2, single buffered']
    #allocation8 [shape = 'u8[131072]{0}', space=vmem, size = 0x20000, scoped, tag = 'output window, operand 0, single buffered']
    %8 = vsyncpa [#allocation3], 0
    %9 = vsyncpa [#allocation6], 0
    %10 = vsyncpa [#allocation4], 0
    // Predicated region
    $region2: #{_lambda_.3} parent=1 // pred_check
      _
    $region3: #{_lambda_.3} parent=1 // pred_check_branch
      %12 = sbr.rel (0) target = $region5
    $region4: #{_lambda_.3} parent=1 // pred_region
      %s14 = ssub.s32 4096, 4096
      %15 = vsyncadd [#allocation3], %s14
      %s16 = sshll.u32 [#allocation2], 4
      %s17 = int_to_ptr.vmem [resolvable:$true] %s16
      %22 = dma.hbm_to_vmem [thread:$0]  %s0, 4096, %s17, [#allocation3], 64, 64, 4
    $region5: #{_lambda_.3} parent=1 // pred_fallthru
      _
    // Predicated region
    $region6: #{_lambda_.3} parent=1 // pred_check
      _
    $region7: #{_lambda_.3} parent=1 // pred_check_branch
      %24 = sbr.rel (0) target = $region9
    $region8: #{_lambda_.3} parent=1 // pred_region
      %s26 = ssub.s32 16, 16
      %27 = vsyncadd [#allocation6], %s26
      %s29 = sshll.u32 [#allocation5], 4
      %s30 = int_to_ptr.vmem [resolvable:$true] %s29
      %32 = dma.hbm_to_vmem [thread:$0]  %s1, 16, %s30, [#allocation6]
    $region9: #{_lambda_.3} parent=1 // pred_fallthru
      _
    // Predicated region
    $region10: #{_lambda_.3} parent=1 // pred_check
      _
    $region11: #{_lambda_.3} parent=1 // pred_check_branch
      %34 = sbr.rel (0) target = $region13
    $region12: #{_lambda_.3} parent=1 // pred_region
      %s36 = ssub.s32 16, 16
      %37 = vsyncadd [#allocation6], %s36
      %s39 = sshll.u32 [#allocation7], 4
      %s40 = int_to_ptr.vmem [resolvable:$true] %s39
      %42 = dma.hbm_to_vmem [thread:$0]  %s2, 16, %s40, [#allocation6]
    $region13: #{_lambda_.3} parent=1 // pred_fallthru
      _
    // Predicated region
    $region14: #{_lambda_.3} parent=1 // pred_check
      _
    $region15: #{_lambda_.3} parent=1 // pred_check_branch
      %44 = sbr.rel (0) target = $region17
    $region16: #{_lambda_.3} parent=1 // pred_region
      %45 = dma.done [#allocation3], 4096
    $region17: #{_lambda_.3} parent=1 // pred_fallthru
      _
    // Predicated region
    $region18: #{_lambda_.3} parent=1 // pred_check
      _
    $region19: #{_lambda_.3} parent=1 // pred_check_branch
      %47 = sbr.rel (0) target = $region21
    $region20: #{_lambda_.3} parent=1 // pred_region
      %48 = dma.done [#allocation6], 16
    $region21: #{_lambda_.3} parent=1 // pred_fallthru
      _
    // Predicated region
    $region22: #{_lambda_.3} parent=1 // pred_check
      _
    $region23: #{_lambda_.3} parent=1 // pred_check_branch
      %50 = sbr.rel (0) target = $region25
    $region24: #{_lambda_.3} parent=1 // pred_region
      %51 = dma.done [#allocation6], 16
    $region25: #{_lambda_.3} parent=1 // pred_fallthru
      _
    %v52 = vld [vmem:[#allocation2] sm:$0xf]
    %v53 = vld [vmem:[#allocation2 + $0x4] sm:$0xf]
    %v54 = vld [vmem:[#allocation2 + $0x8] sm:$0xf]
    %v55 = vld [vmem:[#allocation2 + $0xc] sm:$0xf]
    %v56 = vld [vmem:[#allocation2 + $0x10] sm:$0xf]
    %v57 = vld [vmem:[#allocation2 + $0x14] sm:$0xf]
    %v58 = vld [vmem:[#allocation2 + $0x18] sm:$0xf]
    %v59 = vld [vmem:[#allocation2 + $0x1c] sm:$0xf]
    %v60 = vld [vmem:[#allocation2 + $0x20] sm:$0xf]
    %v61 = vld [vmem:[#allocation2 + $0x24] sm:$0xf]
    %v62 = vld [vmem:[#allocation2 + $0x28] sm:$0xf]
    %v63 = vld [vmem:[#allocation2 + $0x2c] sm:$0xf]
    %v64 = vld [vmem:[#allocation2 + $0x30] sm:$0xf]
    %v65 = vld [vmem:[#allocation2 + $0x34] sm:$0xf]
    %v66 = vld [vmem:[#allocation2 + $0x38] sm:$0xf]
    %v67 = vld [vmem:[#allocation2 + $0x3c] sm:$0xf]
    %v68 = vld [vmem:[#allocation2 + $0x40] sm:$0xf]
    %v69 = vld [vmem:[#allocation2 + $0x44] sm:$0xf]
    %v70 = vld [vmem:[#allocation2 + $0x48] sm:$0xf]
    %v71 = vld [vmem:[#allocation2 + $0x4c] sm:$0xf]
    %v72 = vld [vmem:[#allocation2 + $0x50] sm:$0xf]
    %v73 = vld [vmem:[#allocation2 + $0x54] sm:$0xf]
    %v74 = vld [vmem:[#allocation2 + $0x58] sm:$0xf]
    %v75 = vld [vmem:[#allocation2 + $0x5c] sm:$0xf]
    %v76 = vld [vmem:[#allocation2 + $0x60] sm:$0xf]
    %v77 = vld [vmem:[#allocation2 + $0x64] sm:$0xf]
    %v78 = vld [vmem:[#allocation2 + $0x68] sm:$0xf]
    %v79 = vld [vmem:[#allocation2 + $0x6c] sm:$0xf]
    %v80 = vld [vmem:[#allocation2 + $0x70] sm:$0xf]
    %v81 = vld [vmem:[#allocation2 + $0x74] sm:$0xf]
    %v82 = vld [vmem:[#allocation2 + $0x78] sm:$0xf]
    %v83 = vld [vmem:[#allocation2 + $0x7c] sm:$0xf]
    %v84 = vld [vmem:[#allocation2 + $0x80] sm:$0xf]
    %v85 = vld [vmem:[#allocation2 + $0x84] sm:$0xf]
    %v86 = vld [vmem:[#allocation2 + $0x88] sm:$0xf]
    %v87 = vld [vmem:[#allocation2 + $0x8c] sm:$0xf]
    %v88 = vld [vmem:[#allocation2 + $0x90] sm:$0xf]
    %v89 = vld [vmem:[#allocation2 + $0x94] sm:$0xf]
    %v90 = vld [vmem:[#allocation2 + $0x98] sm:$0xf]
    %v91 = vld [vmem:[#allocation2 + $0x9c] sm:$0xf]
    %v92 = vld [vmem:[#allocation2 + $0xa0] sm:$0xf]
    %v93 = vld [vmem:[#allocation2 + $0xa4] sm:$0xf]
    %v94 = vld [vmem:[#allocation2 + $0xa8] sm:$0xf]
    %v95 = vld [vmem:[#allocation2 + $0xac] sm:$0xf]
    %v96 = vld [vmem:[#allocation2 + $0xb0] sm:$0xf]
    %v97 = vld [vmem:[#allocation2 + $0xb4] sm:$0xf]
    %v98 = vld [vmem:[#allocation2 + $0xb8] sm:$0xf]
    %v99 = vld [vmem:[#allocation2 + $0xbc] sm:$0xf]
    %v100 = vld [vmem:[#allocation2 + $0xc0] sm:$0xf]
    %v101 = vld [vmem:[#allocation2 + $0xc4] sm:$0xf]
    %v102 = vld [vmem:[#allocation2 + $0xc8] sm:$0xf]
    %v103 = vld [vmem:[#allocation2 + $0xcc] sm:$0xf]
    %v104 = vld [vmem:[#allocation2 + $0xd0] sm:$0xf]
    %v105 = vld [vmem:[#allocation2 + $0xd4] sm:$0xf]
    %v106 = vld [vmem:[#allocation2 + $0xd8] sm:$0xf]
    %v107 = vld [vmem:[#allocation2 + $0xdc] sm:$0xf]
    %v108 = vld [vmem:[#allocation2 + $0xe0] sm:$0xf]
    %v109 = vld [vmem:[#allocation2 + $0xe4] sm:$0xf]
    %v110 = vld [vmem:[#allocation2 + $0xe8] sm:$0xf]
    %v111 = vld [vmem:[#allocation2 + $0xec] sm:$0xf]
    %v112 = vld [vmem:[#allocation2 + $0xf0] sm:$0xf]
    %v113 = vld [vmem:[#allocation2 + $0xf4] sm:$0xf]
    %v114 = vld [vmem:[#allocation2 + $0xf8] sm:$0xf]
    %v115 = vld [vmem:[#allocation2 + $0xfc] sm:$0xf]
    %v116 = vunpack.c.l.bf16 %v52
    %v117 = vunpack.c.l.bf16 %v53
    %v118 = vunpack.c.l.bf16 %v54
    %v119 = vunpack.c.l.bf16 %v55
    %v120 = vunpack.c.l.bf16 %v56
    %v121 = vunpack.c.l.bf16 %v57
    %v122 = vunpack.c.l.bf16 %v58
    %v123 = vunpack.c.l.bf16 %v59
    %v124 = vunpack.c.l.bf16 %v60
    %v125 = vunpack.c.l.bf16 %v61
    %v126 = vunpack.c.l.bf16 %v62
    %v127 = vunpack.c.l.bf16 %v63
    %v128 = vunpack.c.l.bf16 %v64
    %v129 = vunpack.c.l.bf16 %v65
    %v130 = vunpack.c.l.bf16 %v66
    %v131 = vunpack.c.l.bf16 %v67
    %v132 = vunpack.c.l.bf16 %v68
    %v133 = vunpack.c.l.bf16 %v69
    %v134 = vunpack.c.l.bf16 %v70
    %v135 = vunpack.c.l.bf16 %v71
    %v136 = vunpack.c.l.bf16 %v72
    %v137 = vunpack.c.l.bf16 %v73
    %v138 = vunpack.c.l.bf16 %v74
    %v139 = vunpack.c.l.bf16 %v75
    %v140 = vunpack.c.l.bf16 %v76
    %v141 = vunpack.c.l.bf16 %v77
    %v142 = vunpack.c.l.bf16 %v78
    %v143 = vunpack.c.l.bf16 %v79
    %v144 = vunpack.c.l.bf16 %v80
    %v145 = vunpack.c.l.bf16 %v81
    %v146 = vunpack.c.l.bf16 %v82
    %v147 = vunpack.c.l.bf16 %v83
    %v148 = vunpack.c.l.bf16 %v84
    %v149 = vunpack.c.l.bf16 %v85
    %v150 = vunpack.c.l.bf16 %v86
    %v151 = vunpack.c.l.bf16 %v87
    %v152 = vunpack.c.l.bf16 %v88
    %v153 = vunpack.c.l.bf16 %v89
    %v154 = vunpack.c.l.bf16 %v90
    %v155 = vunpack.c.l.bf16 %v91
    %v156 = vunpack.c.l.bf16 %v92
    %v157 = vunpack.c.l.bf16 %v93
    %v158 = vunpack.c.l.bf16 %v94
    %v159 = vunpack.c.l.bf16 %v95
    %v160 = vunpack.c.l.bf16 %v96
    %v161 = vunpack.c.l.bf16 %v97
    %v162 = vunpack.c.l.bf16 %v98
    %v163 = vunpack.c.l.bf16 %v99
    %v164 = vunpack.c.l.bf16 %v100
    %v165 = vunpack.c.l.bf16 %v101
    %v166 = vunpack.c.l.bf16 %v102
    %v167 = vunpack.c.l.bf16 %v103
    %v168 = vunpack.c.l.bf16 %v104
    %v169 = vunpack.c.l.bf16 %v105
    %v170 = vunpack.c.l.bf16 %v106
    %v171 = vunpack.c.l.bf16 %v107
    %v172 = vunpack.c.l.bf16 %v108
    %v173 = vunpack.c.l.bf16 %v109
    %v174 = vunpack.c.l.bf16 %v110
    %v175 = vunpack.c.l.bf16 %v111
    %v176 = vunpack.c.l.bf16 %v112
    %v177 = vunpack.c.l.bf16 %v113
    %v178 = vunpack.c.l.bf16 %v114
    %v179 = vunpack.c.l.bf16 %v115
    %v180 = vld [vmem:[#allocation5] sm:$0x1]
    %v182 = vlaneseq
    %v183 = vshrl.u32 %v182, 7
    %v184 = vsub.s32 0, %v183
    %v185 = vrot.slane %v180, %v184
    %v187 = vmul.f32 %v116, %v185
    %v188 = vmul.f32 %v117, %v185
    %v189 = vmul.f32 %v118, %v185
    %v190 = vmul.f32 %v119, %v185
    %v191 = vmul.f32 %v120, %v185
    %v192 = vmul.f32 %v121, %v185
    %v193 = vmul.f32 %v122, %v185
    %v194 = vmul.f32 %v123, %v185
    %v195 = vmul.f32 %v124, %v185
    %v196 = vmul.f32 %v125, %v185
    %v197 = vmul.f32 %v126, %v185
    %v198 = vmul.f32 %v127, %v185
    %v199 = vmul.f32 %v128, %v185
    %v200 = vmul.f32 %v129, %v185
    %v201 = vmul.f32 %v130, %v185
    %v202 = vmul.f32 %v131, %v185
    %v203 = vmul.f32 %v132, %v185
    %v204 = vmul.f32 %v133, %v185
    %v205 = vmul.f32 %v134, %v185
    %v206 = vmul.f32 %v135, %v185
    %v207 = vmul.f32 %v136, %v185
    %v208 = vmul.f32 %v137, %v185
    %v209 = vmul.f32 %v138, %v185
    %v210 = vmul.f32 %v139, %v185
    %v211 = vmul.f32 %v140, %v185
    %v212 = vmul.f32 %v141, %v185
    %v213 = vmul.f32 %v142, %v185
    %v214 = vmul.f32 %v143, %v185
    %v215 = vmul.f32 %v144, %v185
    %v216 = vmul.f32 %v145, %v185
    %v217 = vmul.f32 %v146, %v185
    %v218 = vmul.f32 %v147, %v185
    %v219 = vmul.f32 %v148, %v185
    %v220 = vmul.f32 %v149, %v185
    %v221 = vmul.f32 %v150, %v185
    %v222 = vmul.f32 %v151, %v185
    %v223 = vmul.f32 %v152, %v185
    %v224 = vmul.f32 %v153, %v185
    %v225 = vmul.f32 %v154, %v185
    %v226 = vmul.f32 %v155, %v185
    %v227 = vmul.f32 %v156, %v185
    %v228 = vmul.f32 %v157, %v185
    %v229 = vmul.f32 %v158, %v185
    %v230 = vmul.f32 %v159, %v185
    %v231 = vmul.f32 %v160, %v185
    %v232 = vmul.f32 %v161, %v185
    %v233 = vmul.f32 %v162, %v185
    %v234 = vmul.f32 %v163, %v185
    %v235 = vmul.f32 %v164, %v185
    %v236 = vmul.f32 %v165, %v185
    %v237 = vmul.f32 %v166, %v185
    %v238 = vmul.f32 %v167, %v185
    %v239 = vmul.f32 %v168, %v185
    %v240 = vmul.f32 %v169, %v185
    %v241 = vmul.f32 %v170, %v185
    %v242 = vmul.f32 %v171, %v185
    %v243 = vmul.f32 %v172, %v185
    %v244 = vmul.f32 %v173, %v185
    %v245 = vmul.f32 %v174, %v185
    %v246 = vmul.f32 %v175, %v185
    %v247 = vmul.f32 %v176, %v185
    %v248 = vmul.f32 %v177, %v185
    %v249 = vmul.f32 %v178, %v185
    %v250 = vmul.f32 %v179, %v185
    %v251 = vld [vmem:[#allocation7] sm:$0x1]
    %v253 = vlaneseq
    %v254 = vshrl.u32 %v253, 7
    %v255 = vsub.s32 0, %v254
    %v256 = vrot.slane %v251, %v255
    %v258 = vadd.f32 %v187, %v256
    %v259 = vadd.f32 %v188, %v256
    %v260 = vadd.f32 %v189, %v256
    %v261 = vadd.f32 %v190, %v256
    %v262 = vadd.f32 %v191, %v256
    %v263 = vadd.f32 %v192, %v256
    %v264 = vadd.f32 %v193, %v256
    %v265 = vadd.f32 %v194, %v256
    %v266 = vadd.f32 %v195, %v256
    %v267 = vadd.f32 %v196, %v256
    %v268 = vadd.f32 %v197, %v256
    %v269 = vadd.f32 %v198, %v256
    %v270 = vadd.f32 %v199, %v256
    %v271 = vadd.f32 %v200, %v256
    %v272 = vadd.f32 %v201, %v256
    %v273 = vadd.f32 %v202, %v256
    %v274 = vadd.f32 %v203, %v256
    %v275 = vadd.f32 %v204, %v256
    %v276 = vadd.f32 %v205, %v256
    %v277 = vadd.f32 %v206, %v256
    %v278 = vadd.f32 %v207, %v256
    %v279 = vadd.f32 %v208, %v256
    %v280 = vadd.f32 %v209, %v256
    %v281 = vadd.f32 %v210, %v256
    %v282 = vadd.f32 %v211, %v256
    %v283 = vadd.f32 %v212, %v256
    %v284 = vadd.f32 %v213, %v256
    %v285 = vadd.f32 %v214, %v256
    %v286 = vadd.f32 %v215, %v256
    %v287 = vadd.f32 %v216, %v256
    %v288 = vadd.f32 %v217, %v256
    %v289 = vadd.f32 %v218, %v256
    %v290 = vadd.f32 %v219, %v256
    %v291 = vadd.f32 %v220, %v256
    %v292 = vadd.f32 %v221, %v256
    %v293 = vadd.f32 %v222, %v256
    %v294 = vadd.f32 %v223, %v256
    %v295 = vadd.f32 %v224, %v256
    %v296 = vadd.f32 %v225, %v256
    %v297 = vadd.f32 %v226, %v256
    %v298 = vadd.f32 %v227, %v256
    %v299 = vadd.f32 %v228, %v256
    %v300 = vadd.f32 %v229, %v256
    %v301 = vadd.f32 %v230, %v256
    %v302 = vadd.f32 %v231, %v256
    %v303 = vadd.f32 %v232, %v256
    %v304 = vadd.f32 %v233, %v256
    %v305 = vadd.f32 %v234, %v256
    %v306 = vadd.f32 %v235, %v256
    %v307 = vadd.f32 %v236, %v256
    %v308 = vadd.f32 %v237, %v256
    %v309 = vadd.f32 %v238, %v256
    %v310 = vadd.f32 %v239, %v256
    %v311 = vadd.f32 %v240, %v256
    %v312 = vadd.f32 %v241, %v256
    %v313 = vadd.f32 %v242, %v256
    %v314 = vadd.f32 %v243, %v256
    %v315 = vadd.f32 %v244, %v256
    %v316 = vadd.f32 %v245, %v256
    %v317 = vadd.f32 %v246, %v256
    %v318 = vadd.f32 %v247, %v256
    %v319 = vadd.f32 %v248, %v256
    %v320 = vadd.f32 %v249, %v256
    %v321 = vadd.f32 %v250, %v256
    %v322 = vmax.f32 %v258, 0.0
    %v323 = vmax.f32 %v259, 0.0
    %v324 = vmax.f32 %v260, 0.0
    %v325 = vmax.f32 %v261, 0.0
    %v326 = vmax.f32 %v262, 0.0
    %v327 = vmax.f32 %v263, 0.0
    %v328 = vmax.f32 %v264, 0.0
    %v329 = vmax.f32 %v265, 0.0
    %v330 = vmax.f32 %v266, 0.0
    %v331 = vmax.f32 %v267, 0.0
    %v332 = vmax.f32 %v268, 0.0
    %v333 = vmax.f32 %v269, 0.0
    %v334 = vmax.f32 %v270, 0.0
    %v335 = vmax.f32 %v271, 0.0
    %v336 = vmax.f32 %v272, 0.0
    %v337 = vmax.f32 %v273, 0.0
    %v338 = vmax.f32 %v274, 0.0
    %v339 = vmax.f32 %v275, 0.0
    %v340 = vmax.f32 %v276, 0.0
    %v341 = vmax.f32 %v277, 0.0
    %v342 = vmax.f32 %v278, 0.0
    %v343 = vmax.f32 %v279, 0.0
    %v344 = vmax.f32 %v280, 0.0
    %v345 = vmax.f32 %v281, 0.0
    %v346 = vmax.f32 %v282, 0.0
    %v347 = vmax.f32 %v283, 0.0
    %v348 = vmax.f32 %v284, 0.0
    %v349 = vmax.f32 %v285, 0.0
    %v350 = vmax.f32 %v286, 0.0
    %v351 = vmax.f32 %v287, 0.0
    %v352 = vmax.f32 %v288, 0.0
    %v353 = vmax.f32 %v289, 0.0
    %v354 = vmax.f32 %v290, 0.0
    %v355 = vmax.f32 %v291, 0.0
    %v356 = vmax.f32 %v292, 0.0
    %v357 = vmax.f32 %v293, 0.0
    %v358 = vmax.f32 %v294, 0.0
    %v359 = vmax.f32 %v295, 0.0
    %v360 = vmax.f32 %v296, 0.0
    %v361 = vmax.f32 %v297, 0.0
    %v362 = vmax.f32 %v298, 0.0
    %v363 = vmax.f32 %v299, 0.0
    %v364 = vmax.f32 %v300, 0.0
    %v365 = vmax.f32 %v301, 0.0
    %v366 = vmax.f32 %v302, 0.0
    %v367 = vmax.f32 %v303, 0.0
    %v368 = vmax.f32 %v304, 0.0
    %v369 = vmax.f32 %v305, 0.0
    %v370 = vmax.f32 %v306, 0.0
    %v371 = vmax.f32 %v307, 0.0
    %v372 = vmax.f32 %v308, 0.0
    %v373 = vmax.f32 %v309, 0.0
    %v374 = vmax.f32 %v310, 0.0
    %v375 = vmax.f32 %v311, 0.0
    %v376 = vmax.f32 %v312, 0.0
    %v377 = vmax.f32 %v313, 0.0
    %v378 = vmax.f32 %v314, 0.0
    %v379 = vmax.f32 %v315, 0.0
    %v380 = vmax.f32 %v316, 0.0
    %v381 = vmax.f32 %v317, 0.0
    %v382 = vmax.f32 %v318, 0.0
    %v383 = vmax.f32 %v319, 0.0
    %v384 = vmax.f32 %v320, 0.0
    %v385 = vmax.f32 %v321, 0.0
    %v386 = vpack.c.bf16 %v323, %v322
    %v387 = vpack.c.bf16 %v325, %v324
    %v388 = vpack.c.bf16 %v327, %v326
    %v389 = vpack.c.bf16 %v329, %v328
    %v390 = vpack.c.bf16 %v331, %v330
    %v391 = vpack.c.bf16 %v333, %v332
    %v392 = vpack.c.bf16 %v335, %v334
    %v393 = vpack.c.bf16 %v337, %v336
    %v394 = vpack.c.bf16 %v339, %v338
    %v395 = vpack.c.bf16 %v341, %v340
    %v396 = vpack.c.bf16 %v343, %v342
    %v397 = vpack.c.bf16 %v345, %v344
    %v398 = vpack.c.bf16 %v347, %v346
    %v399 = vpack.c.bf16 %v349, %v348
    %v400 = vpack.c.bf16 %v351, %v350
    %v401 = vpack.c.bf16 %v353, %v352
    %v402 = vpack.c.bf16 %v355, %v354
    %v403 = vpack.c.bf16 %v357, %v356
    %v404 = vpack.c.bf16 %v359, %v358
    %v405 = vpack.c.bf16 %v361, %v360
    %v406 = vpack.c.bf16 %v363, %v362
    %v407 = vpack.c.bf16 %v365, %v364
    %v408 = vpack.c.bf16 %v367, %v366
    %v409 = vpack.c.bf16 %v369, %v368
    %v410 = vpack.c.bf16 %v371, %v370
    %v411 = vpack.c.bf16 %v373, %v372
    %v412 = vpack.c.bf16 %v375, %v374
    %v413 = vpack.c.bf16 %v377, %v376
    %v414 = vpack.c.bf16 %v379, %v378
    %v415 = vpack.c.bf16 %v381, %v380
    %v416 = vpack.c.bf16 %v383, %v382
    %v417 = vpack.c.bf16 %v385, %v384
    %v450 = vunpack.c.l.b16 %v386
    %v451 = vunpack.c.h.b16 %v386
    %v452 = vunpack.c.l.b16 %v387
    %v453 = vunpack.c.h.b16 %v387
    %v454 = vunpack.c.l.b16 %v388
    %v455 = vunpack.c.h.b16 %v388
    %v456 = vunpack.c.l.b16 %v389
    %v457 = vunpack.c.h.b16 %v389
    %v458 = vunpack.c.l.b16 %v390
    %v459 = vunpack.c.h.b16 %v390
    %v460 = vunpack.c.l.b16 %v391
    %v461 = vunpack.c.h.b16 %v391
    %v462 = vunpack.c.l.b16 %v392
    %v463 = vunpack.c.h.b16 %v392
    %v464 = vunpack.c.l.b16 %v393
    %v465 = vunpack.c.h.b16 %v393
    %v466 = vunpack.c.l.b16 %v394
    %v467 = vunpack.c.h.b16 %v394
    %v468 = vunpack.c.l.b16 %v395
    %v469 = vunpack.c.h.b16 %v395
    %v470 = vunpack.c.l.b16 %v396
    %v471 = vunpack.c.h.b16 %v396
    %v472 = vunpack.c.l.b16 %v397
    %v473 = vunpack.c.h.b16 %v397
    %v474 = vunpack.c.l.b16 %v398
    %v475 = vunpack.c.h.b16 %v398
    %v476 = vunpack.c.l.b16 %v399
    %v477 = vunpack.c.h.b16 %v399
    %v478 = vunpack.c.l.b16 %v400
    %v479 = vunpack.c.h.b16 %v400
    %v480 = vunpack.c.l.b16 %v401
    %v481 = vunpack.c.h.b16 %v401
    %v482 = vunpack.c.l.b16 %v402
    %v483 = vunpack.c.h.b16 %v402
    %v484 = vunpack.c.l.b16 %v403
    %v485 = vunpack.c.h.b16 %v403
    %v486 = vunpack.c.l.b16 %v404
    %v487 = vunpack.c.h.b16 %v404
    %v488 = vunpack.c.l.b16 %v405
    %v489 = vunpack.c.h.b16 %v405
    %v490 = vunpack.c.l.b16 %v406
    %v491 = vunpack.c.h.b16 %v406
    %v492 = vunpack.c.l.b16 %v407
    %v493 = vunpack.c.h.b16 %v407
    %v494 = vunpack.c.l.b16 %v408
    %v495 = vunpack.c.h.b16 %v408
    %v496 = vunpack.c.l.b16 %v409
    %v497 = vunpack.c.h.b16 %v409
    %v498 = vunpack.c.l.b16 %v410
    %v499 = vunpack.c.h.b16 %v410
    %v500 = vunpack.c.l.b16 %v411
    %v501 = vunpack.c.h.b16 %v411
    %v502 = vunpack.c.l.b16 %v412
    %v503 = vunpack.c.h.b16 %v412
    %v504 = vunpack.c.l.b16 %v413
    %v505 = vunpack.c.h.b16 %v413
    %v506 = vunpack.c.l.b16 %v414
    %v507 = vunpack.c.h.b16 %v414
    %v508 = vunpack.c.l.b16 %v415
    %v509 = vunpack.c.h.b16 %v415
    %v510 = vunpack.c.l.b16 %v416
    %v511 = vunpack.c.h.b16 %v416
    %v512 = vunpack.c.l.b16 %v417
    %v513 = vunpack.c.h.b16 %v417
    %v514 = vpack.c.b16 %v450, %v450
    %v515 = vpack.c.b16 %v451, %v451
    %v516 = vpack.c.b16 %v452, %v452
    %v517 = vpack.c.b16 %v453, %v453
    %v518 = vpack.c.b16 %v454, %v454
    %v519 = vpack.c.b16 %v455, %v455
    %v520 = vpack.c.b16 %v456, %v456
    %v521 = vpack.c.b16 %v457, %v457
    %v522 = vpack.c.b16 %v458, %v458
    %v523 = vpack.c.b16 %v459, %v459
    %v524 = vpack.c.b16 %v460, %v460
    %v525 = vpack.c.b16 %v461, %v461
    %v526 = vpack.c.b16 %v462, %v462
    %v527 = vpack.c.b16 %v463, %v463
    %v528 = vpack.c.b16 %v464, %v464
    %v529 = vpack.c.b16 %v465, %v465
    %v530 = vpack.c.b16 %v466, %v466
    %v531 = vpack.c.b16 %v467, %v467
    %v532 = vpack.c.b16 %v468, %v468
    %v533 = vpack.c.b16 %v469, %v469
    %v534 = vpack.c.b16 %v470, %v470
    %v535 = vpack.c.b16 %v471, %v471
    %v536 = vpack.c.b16 %v472, %v472
    %v537 = vpack.c.b16 %v473, %v473
    %v538 = vpack.c.b16 %v474, %v474
    %v539 = vpack.c.b16 %v475, %v475
    %v540 = vpack.c.b16 %v476, %v476
    %v541 = vpack.c.b16 %v477, %v477
    %v542 = vpack.c.b16 %v478, %v478
    %v543 = vpack.c.b16 %v479, %v479
    %v544 = vpack.c.b16 %v480, %v480
    %v545 = vpack.c.b16 %v481, %v481
    %v546 = vpack.c.b16 %v482, %v482
    %v547 = vpack.c.b16 %v483, %v483
    %v548 = vpack.c.b16 %v484, %v484
    %v549 = vpack.c.b16 %v485, %v485
    %v550 = vpack.c.b16 %v486, %v486
    %v551 = vpack.c.b16 %v487, %v487
    %v552 = vpack.c.b16 %v488, %v488
    %v553 = vpack.c.b16 %v489, %v489
    %v554 = vpack.c.b16 %v490, %v490
    %v555 = vpack.c.b16 %v491, %v491
    %v556 = vpack.c.b16 %v492, %v492
    %v557 = vpack.c.b16 %v493, %v493
    %v558 = vpack.c.b16 %v494, %v494
    %v559 = vpack.c.b16 %v495, %v495
    %v560 = vpack.c.b16 %v496, %v496
    %v561 = vpack.c.b16 %v497, %v497
    %v562 = vpack.c.b16 %v498, %v498
    %v563 = vpack.c.b16 %v499, %v499
    %v564 = vpack.c.b16 %v500, %v500
    %v565 = vpack.c.b16 %v501, %v501
    %v566 = vpack.c.b16 %v502, %v502
    %v567 = vpack.c.b16 %v503, %v503
    %v568 = vpack.c.b16 %v504, %v504
    %v569 = vpack.c.b16 %v505, %v505
    %v570 = vpack.c.b16 %v506, %v506
    %v571 = vpack.c.b16 %v507, %v507
    %v572 = vpack.c.b16 %v508, %v508
    %v573 = vpack.c.b16 %v509, %v509
    %v574 = vpack.c.b16 %v510, %v510
    %v575 = vpack.c.b16 %v511, %v511
    %v576 = vpack.c.b16 %v512, %v512
    %v577 = vpack.c.b16 %v513, %v513
    %vm642 = vcmask 60416
    %643 = vst.msk [vmem:[#allocation8] sm:$0xf] %vm642, %v514
    %644 = vst.msk [vmem:[#allocation8 + $0x4] sm:$0xf] %vm642, %v515
    %645 = vst.msk [vmem:[#allocation8 + $0x8] sm:$0xf] %vm642, %v516
    %646 = vst.msk [vmem:[#allocation8 + $0xc] sm:$0xf] %vm642, %v517
    %647 = vst.msk [vmem:[#allocation8 + $0x10] sm:$0xf] %vm642, %v518
    %648 = vst.msk [vmem:[#allocation8 + $0x14] sm:$0xf] %vm642, %v519
    %649 = vst.msk [vmem:[#allocation8 + $0x18] sm:$0xf] %vm642, %v520
    %650 = vst.msk [vmem:[#allocation8 + $0x1c] sm:$0xf] %vm642, %v521
    %651 = vst.msk [vmem:[#allocation8 + $0x20] sm:$0xf] %vm642, %v522
    %652 = vst.msk [vmem:[#allocation8 + $0x24] sm:$0xf] %vm642, %v523
    %653 = vst.msk [vmem:[#allocation8 + $0x28] sm:$0xf] %vm642, %v524
    %654 = vst.msk [vmem:[#allocation8 + $0x2c] sm:$0xf] %vm642, %v525
    %655 = vst.msk [vmem:[#allocation8 + $0x30] sm:$0xf] %vm642, %v526
    %656 = vst.msk [vmem:[#allocation8 + $0x34] sm:$0xf] %vm642, %v527
    %657 = vst.msk [vmem:[#allocation8 + $0x38] sm:$0xf] %vm642, %v528
    %658 = vst.msk [vmem:[#allocation8 + $0x3c] sm:$0xf] %vm642, %v529
    %659 = vst.msk [vmem:[#allocation8 + $0x40] sm:$0xf] %vm642, %v530
    %660 = vst.msk [vmem:[#allocation8 + $0x44] sm:$0xf] %vm642, %v531
    %661 = vst.msk [vmem:[#allocation8 + $0x48] sm:$0xf] %vm642, %v532
    %662 = vst.msk [vmem:[#allocation8 + $0x4c] sm:$0xf] %vm642, %v533
    %663 = vst.msk [vmem:[#allocation8 + $0x50] sm:$0xf] %vm642, %v534
    %664 = vst.msk [vmem:[#allocation8 + $0x54] sm:$0xf] %vm642, %v535
    %665 = vst.msk [vmem:[#allocation8 + $0x58] sm:$0xf] %vm642, %v536
    %666 = vst.msk [vmem:[#allocation8 + $0x5c] sm:$0xf] %vm642, %v537
    %667 = vst.msk [vmem:[#allocation8 + $0x60] sm:$0xf] %vm642, %v538
    %668 = vst.msk [vmem:[#allocation8 + $0x64] sm:$0xf] %vm642, %v539
    %669 = vst.msk [vmem:[#allocation8 + $0x68] sm:$0xf] %vm642, %v540
    %670 = vst.msk [vmem:[#allocation8 + $0x6c] sm:$0xf] %vm642, %v541
    %671 = vst.msk [vmem:[#allocation8 + $0x70] sm:$0xf] %vm642, %v542
    %672 = vst.msk [vmem:[#allocation8 + $0x74] sm:$0xf] %vm642, %v543
    %673 = vst.msk [vmem:[#allocation8 + $0x78] sm:$0xf] %vm642, %v544
    %674 = vst.msk [vmem:[#allocation8 + $0x7c] sm:$0xf] %vm642, %v545
    %675 = vst.msk [vmem:[#allocation8 + $0x80] sm:$0xf] %vm642, %v546
    %676 = vst.msk [vmem:[#allocation8 + $0x84] sm:$0xf] %vm642, %v547
    %677 = vst.msk [vmem:[#allocation8 + $0x88] sm:$0xf] %vm642, %v548
    %678 = vst.msk [vmem:[#allocation8 + $0x8c] sm:$0xf] %vm642, %v549
    %679 = vst.msk [vmem:[#allocation8 + $0x90] sm:$0xf] %vm642, %v550
    %680 = vst.msk [vmem:[#allocation8 + $0x94] sm:$0xf] %vm642, %v551
    %681 = vst.msk [vmem:[#allocation8 + $0x98] sm:$0xf] %vm642, %v552
    %682 = vst.msk [vmem:[#allocation8 + $0x9c] sm:$0xf] %vm642, %v553
    %683 = vst.msk [vmem:[#allocation8 + $0xa0] sm:$0xf] %vm642, %v554
    %684 = vst.msk [vmem:[#allocation8 + $0xa4] sm:$0xf] %vm642, %v555
    %685 = vst.msk [vmem:[#allocation8 + $0xa8] sm:$0xf] %vm642, %v556
    %686 = vst.msk [vmem:[#allocation8 + $0xac] sm:$0xf] %vm642, %v557
    %687 = vst.msk [vmem:[#allocation8 + $0xb0] sm:$0xf] %vm642, %v558
    %688 = vst.msk [vmem:[#allocation8 + $0xb4] sm:$0xf] %vm642, %v559
    %689 = vst.msk [vmem:[#allocation8 + $0xb8] sm:$0xf] %vm642, %v560
    %690 = vst.msk [vmem:[#allocation8 + $0xbc] sm:$0xf] %vm642, %v561
    %691 = vst.msk [vmem:[#allocation8 + $0xc0] sm:$0xf] %vm642, %v562
    %692 = vst.msk [vmem:[#allocation8 + $0xc4] sm:$0xf] %vm642, %v563
    %693 = vst.msk [vmem:[#allocation8 + $0xc8] sm:$0xf] %vm642, %v564
    %694 = vst.msk [vmem:[#allocation8 + $0xcc] sm:$0xf] %vm642, %v565
    %695 = vst.msk [vmem:[#allocation8 + $0xd0] sm:$0xf] %vm642, %v566
    %696 = vst.msk [vmem:[#allocation8 + $0xd4] sm:$0xf] %vm642, %v567
    %697 = vst.msk [vmem:[#allocation8 + $0xd8] sm:$0xf] %vm642, %v568
    %698 = vst.msk [vmem:[#allocation8 + $0xdc] sm:$0xf] %vm642, %v569
    %699 = vst.msk [vmem:[#allocation8 + $0xe0] sm:$0xf] %vm642, %v570
    %700 = vst.msk [vmem:[#allocation8 + $0xe4] sm:$0xf] %vm642, %v571
    %701 = vst.msk [vmem:[#allocation8 + $0xe8] sm:$0xf] %vm642, %v572
    %702 = vst.msk [vmem:[#allocation8 + $0xec] sm:$0xf] %vm642, %v573
    %703 = vst.msk [vmem:[#allocation8 + $0xf0] sm:$0xf] %vm642, %v574
    %704 = vst.msk [vmem:[#allocation8 + $0xf4] sm:$0xf] %vm642, %v575
    %705 = vst.msk [vmem:[#allocation8 + $0xf8] sm:$0xf] %vm642, %v576
    %706 = vst.msk [vmem:[#allocation8 + $0xfc] sm:$0xf] %vm642, %v577
    // Predicated region
    $region26: #{_lambda_.3} parent=1 // pred_check
      _
    $region27: #{_lambda_.3} parent=1 // pred_check_branch
      %708 = sbr.rel (0) target = $region29
    $region28: #{_lambda_.3} parent=1 // pred_region
      %s710 = ssub.s32 4096, 4096
      %711 = vsyncadd [#allocation4], %s710
      %s712 = sshll.u32 [#allocation8], 4
      %s713 = int_to_ptr.vmem [resolvable:$true] %s712
      %718 = dma.vmem_to_hbm [thread:$0]  %s713, 4096, %s3, [#allocation4], 64, 64, 4
    $region29: #{_lambda_.3} parent=1 // pred_fallthru
      _
    // Predicated region
    $region30: #{_lambda_.3} parent=1 // pred_check
      _
    $region31: #{_lambda_.3} parent=1 // pred_check_branch
      %720 = sbr.rel (0) target = $region33
    $region32: #{_lambda_.3} parent=1 // pred_region
      %721 = dma.done [#allocation4], 4096
    $region33: #{_lambda_.3} parent=1 // pred_fallthru
      _
    %722 = vsyncpa [#allocation3], 1
    %723 = vsyncpa [#allocation6], 1
    %724 = vsyncpa [#allocation4], 1

</llo_original>
